<compile_context>
chip_gen: v7x
topology: tpu7x:2x2x1
jax: 0.10.0
libtpu: 0.0.40
codegen_flags: <defaults>
</compile_context>

<pallas_src>
import functools

import jax
import jax.numpy as jnp
from jax.experimental import pallas as pl
from jax.experimental.pallas import tpu as pltpu


def _round_up(x, m):
    return (x + m - 1) // m * m


# ---------------------------------------------------------------------------
# Pallas kernel
# ---------------------------------------------------------------------------
def _distortion_attention_kernel(
    x_ref,    # (HW, Cp)  f32  full image for this batch element (resident across qi)
    wq_ref,   # (Cp, QKp) bf16 (softmax scale folded in)
    wk_ref,   # (Cp, QKp) bf16
    wv_ref,   # (Cp, Cp)  bf16
    bq_ref,   # (1, QKp)  f32  (scale folded in)
    bk_ref,   # (1, QKp)  f32
    bv_ref,   # (1, Cp)   f32
    o_ref,    # (TQ, Cp)  output tile for this (batch, query-row) step
    k_scr,    # VMEM (HW, QKp) bf16 scratch (persists across qi)
    v_scr,    # VMEM (HW, Cp)  bf16 scratch (persists across qi)
    *,
    tq: int,
):
    qi = pl.program_id(1)

    # K / V projection for the whole image, once per batch element: bf16 operands
    # (native MXU rate), f32 accumulation, bias in f32, written directly into the
    # resident bf16 scratch.
    @pl.when(qi == 0)
    def _():
        x_bf = x_ref[...].astype(jnp.bfloat16)                            # (HW, Cp)
        k = jnp.dot(x_bf, wk_ref[...],
                    preferred_element_type=jnp.float32) + bk_ref[...]     # (HW, QKp) f32
        k_scr[...] = k.astype(jnp.bfloat16)
        v = jnp.dot(x_bf, wv_ref[...],
                    preferred_element_type=jnp.float32) + bv_ref[...]     # (HW, Cp) f32
        v_scr[...] = v.astype(jnp.bfloat16)

    row = pl.multiple_of(qi * tq, tq)
    x_tile = x_ref[pl.ds(row, tq), :]                                     # (TQ, Cp) f32

    # Q for just this query-row tile (no whole-image Q cache): TQ*Cp*QKp extra MXU
    # flops per step, negligible vs the TQ*HW*QKp score matmul.
    q = (jnp.dot(x_tile.astype(jnp.bfloat16), wq_ref[...],
                 preferred_element_type=jnp.float32)
         + bq_ref[...]).astype(jnp.bfloat16)                              # (TQ, QKp) bf16

    # S = Q @ K^T (scale already folded into Wq/bq).  Trans-B dimension numbers map
    # to the MXU's native transposed-RHS matmul (same as the reference flash-attention
    # kernel), so no per-step XLU transpose of K is emitted.
    s = jax.lax.dot_general(
        q, k_scr[...], (((1,), (1,)), ((), ())),
        preferred_element_type=jnp.float32)                               # (TQ, HW) f32

    # Row softmax with deferred normalization.  Row max in f32, exp in bf16
    # (EUP/VPU are bf16-capable on v6e/v7x; auto-widened on v5e), denominator
    # accumulated in f32 from the SAME bf16 probabilities used for P@V.
    m = jnp.max(s, axis=-1, keepdims=True)                                # (TQ, 1) f32
    p = jnp.exp((s - m).astype(jnp.bfloat16))                             # (TQ, HW) bf16
    denom = jnp.sum(p, axis=-1, keepdims=True, dtype=jnp.float32)         # (TQ, 1) f32

    # out = P @ V with bf16 operands, f32 accumulate.
    out_un = jnp.dot(p, v_scr[...], preferred_element_type=jnp.float32)   # (TQ, Cp) f32

    o_ref[...] = (out_un * pl.reciprocal(denom, approx=True)
                  + x_tile).astype(o_ref.dtype)


# ---------------------------------------------------------------------------
# Tiling / VMEM budgeting helpers (generation-aware)
# ---------------------------------------------------------------------------
def _vmem_capacity_bytes():
    # 128 MiB on v5e/v6e, 64 MiB per TC on v7x; conservative fallback if the
    # query is unavailable.
    try:
        cap = int(pltpu.get_tpu_info().vmem_capacity_bytes)
        if cap > 0:
            return cap
    except Exception:
        pass
    return 64 << 20


def _vmem_estimate(hw, cp, qkp, tq):
    f32, bf16 = 4, 2
    return (
        2 * hw * cp * f32                        # x block (double-buffered by BlockSpec)
        # TODO(synk): pipeline_mode=pl.Buffered(1) on the x BlockSpec (or pl.ANY +
        # one manual DMA at qi==0) would drop this to 1x on v7x; x only changes
        # once per batch element.
        + 2 * tq * cp * f32                      # output block (double-buffered)
        + 2 * (2 * cp * qkp + cp * cp) * bf16    # w_q / w_k / w_v blocks
        + 2 * 8 * (2 * qkp + cp) * f32           # bias blocks (sublane-padded)
        + hw * (qkp + cp) * bf16                 # resident K/V bf16 scratch
        + hw * cp * bf16 + hw * (qkp + cp) * f32  # qi==0 projection temporaries
        + tq * hw * (f32 + 2 * bf16)             # s (f32), (s-m) bf16, p bf16
        + tq * cp * (2 * f32 + 2 * bf16)         # x_tile, out_un, casts
        + tq * qkp * (f32 + bf16)                # q (f32 then bf16)
    )


def _choose_tq(hw, cp, qkp, budget):
    candidates = (2048, 1024, 512, 256, 128, 64, 32, 16, 8)
    divisors = [t for t in candidates if t <= hw and hw % t == 0]
    for t in divisors:
        if _vmem_estimate(hw, cp, qkp, t) <= budget:
            return t
    if divisors:
        # Degrade gracefully to the smallest divisor tile instead of block == HW.
        # TODO(synk): for very large HW (where x + K/V residency no longer fits),
        # switch to a KV-streaming / online-softmax variant with a third grid axis
        # so VMEM is bounded independent of HW.
        return divisors[-1]
    return hw  # tiny / odd HW: one block per batch element


def distortion_attention_pallas(x_t, w_q, w_k, w_v, b_q, b_k, b_v, *, tq=None):
    """x_t: (B, HW, Cp) f32; weights bf16 lane-padded; biases f32 (1, lanes)."""
    b, hw, cp = x_t.shape
    qkp = w_q.shape[1]

    cap = _vmem_capacity_bytes()
    if tq is None:
        tq = _choose_tq(hw, cp, qkp, budget=int(0.7 * cap))
    assert hw % tq == 0, (hw, tq)

    est = _vmem_estimate(hw, cp, qkp, tq)
    # Explicit VMEM limit derived from the chosen tiles (+ slack), leaving headroom
    # for Mosaic internal scratch under the physical capacity of the running chip.
    vmem_limit = int(min(max(est + (4 << 20), 32 << 20), cap - (8 << 20)))

    kernel = functools.partial(_distortion_attention_kernel, tq=tq)

    # Advisory cost estimate so XLA schedules the wrapper transpose/pad/slice ops
    # around the long-running custom call.
    flops = 2 * b * (hw * hw * (qkp + cp) + hw * cp * (2 * qkp + cp))
    cost = pl.CostEstimate(
        flops=int(flops),
        transcendentals=int(b * hw * hw),
        bytes_accessed=int(2 * b * hw * cp * 4 + (2 * cp * qkp + cp * cp) * 2),
    )

    return pl.pallas_call(
        kernel,
        out_shape=jax.ShapeDtypeStruct((b, hw, cp), x_t.dtype),
        grid_spec=pltpu.PrefetchScalarGridSpec(
            num_scalar_prefetch=0,
            grid=(b, hw // tq),
            in_specs=[
                # Full image resident across query-row steps (index ignores qi,
                # so it is only re-DMAed when the batch index changes).
                pl.BlockSpec((None, hw, cp), lambda bi, qi: (bi, 0, 0)),
                pl.BlockSpec((cp, qkp), lambda bi, qi: (0, 0)),   # w_q (scaled)
                pl.BlockSpec((cp, qkp), lambda bi, qi: (0, 0)),   # w_k
                pl.BlockSpec((cp, cp), lambda bi, qi: (0, 0)),    # w_v
                pl.BlockSpec((1, qkp), lambda bi, qi: (0, 0)),    # b_q (scaled)
                pl.BlockSpec((1, qkp), lambda bi, qi: (0, 0)),    # b_k
                pl.BlockSpec((1, cp), lambda bi, qi: (0, 0)),     # b_v
            ],
            out_specs=pl.BlockSpec((None, tq, cp), lambda bi, qi: (bi, qi, 0)),
            scratch_shapes=[
                pltpu.VMEM((hw, qkp), jnp.bfloat16),   # K (resident per batch element)
                pltpu.VMEM((hw, cp), jnp.bfloat16),    # V (resident per batch element)
            ],
        ),
        compiler_params=pltpu.CompilerParams(
            # Query-row axis must be "arbitrary": the K/V scratch is filled at
            # qi == 0 and reused across qi.  Batch axis is "parallel" (megacore).
            # TODO(synk): for B=1 inference on v7x, add a leading parallel
            # core-split axis with per-core K/V projection so both TensorCores work.
            dimension_semantics=("parallel", "arbitrary"),
            vmem_limit_bytes=vmem_limit,
        ),
        cost_estimate=cost,
    )(x_t, w_q, w_k, w_v, b_q, b_k, b_v)


# ---------------------------------------------------------------------------
# DistortionClassifier branch (plain JAX glue; its argmax output is discarded
# by the torch forward, so it is gated off by default).
# ---------------------------------------------------------------------------
def _distortion_classifier(x_nchw, p):
    dn = ("NCHW", "OIHW", "NCHW")
    y = jax.lax.conv_general_dilated(
        x_nchw, p["c1_w"], window_strides=(2, 2), padding=((1, 1), (1, 1)),
        dimension_numbers=dn)
    y = jnp.maximum(y + p["c1_b"][None, :, None, None], 0.0)
    y = jax.lax.conv_general_dilated(
        y, p["c2_w"], window_strides=(2, 2), padding=((1, 1), (1, 1)),
        dimension_numbers=dn)
    y = jnp.maximum(y + p["c2_b"][None, :, None, None], 0.0)
    y = jnp.mean(y, axis=(2, 3))           # AdaptiveAvgPool2d((1,1)) + flatten
    return y @ p["fc_w"].T + p["fc_b"]     # (B, 25)


# ---------------------------------------------------------------------------
# Full module forward
# ---------------------------------------------------------------------------
def distortion_attention_forward(x_nchw, params, *, run_classifier=False, tq=None):
    b, c, h, w = x_nchw.shape
    hw = h * w
    qk = max(1, c // 8)
    cp = _round_up(c, 128)                 # lane-dense channel padding
    qkp = _round_up(qk, 128)
    scale = float(qk) ** -0.5              # query.size(-1) ** -0.5 in torch

    if run_classifier:
        # Result is argmax'ed and then discarded by the torch forward; it never
        # influences the returned tensor, so it is skipped by default.
        logits = _distortion_classifier(x_nchw, params)
        _ = jnp.argmax(logits, axis=1)

    # NCHW -> (B, HW, Cp), zero-padded channels.
    x_t = jnp.transpose(x_nchw.reshape(b, c, hw), (0, 2, 1))
    if cp != c:
        x_t = jnp.pad(x_t, ((0, 0), (0, 0), (0, cp - c)))

    def pad2(m, rows, cols):
        return jnp.pad(m, ((0, rows - m.shape[0]), (0, cols - m.shape[1])))

    # Lane-padded bf16 weights (softmax scale folded into the query branch);
    # biases stay f32 and are added after the f32-accumulated dot.
    w_q = pad2(params["q_w"][:, :, 0, 0].T * scale, cp, qkp).astype(jnp.bfloat16)
    w_k = pad2(params["k_w"][:, :, 0, 0].T, cp, qkp).astype(jnp.bfloat16)
    w_v = pad2(params["v_w"][:, :, 0, 0].T, cp, cp).astype(jnp.bfloat16)
    b_q = jnp.pad(params["q_b"] * scale, (0, qkp - qk))[None, :]
    b_k = jnp.pad(params["k_b"], (0, qkp - qk))[None, :]
    b_v = jnp.pad(params["v_b"], (0, cp - c))[None, :]

    out_t = distortion_attention_pallas(x_t, w_q, w_k, w_v, b_q, b_k, b_v, tq=tq)

    # (B, HW, Cp) -> NCHW (drop the zero channel padding; padded lanes are exact zeros).
    out_t = out_t[:, :, :c]
    return jnp.transpose(out_t, (0, 2, 1)).reshape(b, c, h, w)


# ---------------------------------------------------------------------------
# Deterministic parameter initialization (synthetic; shapes match the module)
# ---------------------------------------------------------------------------
def init_params(key, in_channels, num_distortions=25):
    qk = max(1, in_channels // 8)
    ks = jax.random.split(key, 12)

    def u(k, shape, scale=0.1):
        return jax.random.uniform(k, shape, jnp.float32, -scale, scale)

    return {
        # DistortionAttention projections (1x1 convs)
        "q_w": u(ks[0], (qk, in_channels, 1, 1)),
        "q_b": u(ks[1], (qk,)),
        "k_w": u(ks[2], (qk, in_channels, 1, 1)),
        "k_b": u(ks[3], (qk,)),
        "v_w": u(ks[4], (in_channels, in_channels, 1, 1)),
        "v_b": u(ks[5], (in_channels,)),
        # DistortionClassifier
        "c1_w": u(ks[6], (64, in_channels, 3, 3)),
        "c1_b": u(ks[7], (64,)),
        "c2_w": u(ks[8], (128, 64, 3, 3)),
        "c2_b": u(ks[9], (128,)),
        "fc_w": u(ks[10], (num_distortions, 128)),
        "fc_b": u(ks[11], (num_distortions,)),
    }


# ---------------------------------------------------------------------------
# Pure-JAX (f32) reference for a sanity check
# ---------------------------------------------------------------------------
def _reference_forward(x_nchw, params):
    b, c, h, w = x_nchw.shape
    hw = h * w
    qk = max(1, c // 8)
    x_flat = x_nchw.reshape(b, c, hw)                                  # (b, c, hw)
    q = jnp.einsum("oc,bcs->bos", params["q_w"][:, :, 0, 0], x_flat) + params["q_b"][None, :, None]
    k = jnp.einsum("oc,bcs->bos", params["k_w"][:, :, 0, 0], x_flat) + params["k_b"][None, :, None]
    v = jnp.einsum("oc,bcs->bos", params["v_w"][:, :, 0, 0], x_flat) + params["v_b"][None, :, None]
    query = jnp.transpose(q, (0, 2, 1))                                # (b, hw, qk)
    scale = float(qk) ** -0.5
    attn = jax.nn.softmax(jnp.einsum("bik,bkj->bij", query, k) * scale, axis=-1)
    out = jnp.einsum("bcj,bij->bci", v, attn).reshape(b, c, h, w)
    return out + x_nchw


if __name__ == "__main__":
    B, C, H, W = 2, 16, 16, 16   # in_channels=16 -> query/key channels = 2, HW = 256
    key = jax.random.PRNGKey(0)
    k_x, k_p = jax.random.split(key)
    x = jax.random.normal(k_x, (B, C, H, W), dtype=jnp.float32)
    params = init_params(k_p, C)

    ref = jax.block_until_ready(_reference_forward(x, params))

    # Default (auto) tiling, and an explicit smaller TQ that forces multiple
    # query-row grid steps per batch element (exercises the K/V scratch reuse).
    for tq in (None, 64):
        out = jax.block_until_ready(distortion_attention_forward(x, params, tq=tq))
        assert out.shape == (B, C, H, W)
        err = float(jnp.max(jnp.abs(out - ref)))
        # bf16 MXU operands, bf16 exp and approx reciprocal -> compare against
        # the f32 reference with a correspondingly relaxed tolerance.
        assert jnp.allclose(out, ref, atol=2e-2, rtol=2e-2), err

    print("KERNEL_OK")
</pallas_src>

<mosaic_0001>
module attributes {stable_mosaic.version = 11 : i64} {
  func.func @_distortion_attention_kernel(%arg0: i32, %arg1: i32, %arg2: memref<1x256x128xf32, #tpu.memory_space<vmem>>, %arg3: memref<128x128xbf16, #tpu.memory_space<vmem>>, %arg4: memref<128x128xbf16, #tpu.memory_space<vmem>>, %arg5: memref<128x128xbf16, #tpu.memory_space<vmem>>, %arg6: memref<1x128xf32, #tpu.memory_space<vmem>>, %arg7: memref<1x128xf32, #tpu.memory_space<vmem>>, %arg8: memref<1x128xf32, #tpu.memory_space<vmem>>, %arg9: memref<1x256x128xf32, #tpu.memory_space<vmem>>, %arg10: memref<256x128xbf16, #tpu.memory_space<vmem>>, %arg11: memref<256x128xbf16, #tpu.memory_space<vmem>>) attributes {dimension_semantics = [#tpu.dimension_semantics<parallel>, #tpu.dimension_semantics<arbitrary>], iteration_bounds = array<i64: 2, 1>, scalar_prefetch = 0 : i64, scratch_operands = 2 : i64, tpu.core_type = #tpu.core_type<tc>, window_params = [{transform_indices = @transform_0, window_bounds = array<i64: 1, 256, 128>}, {pipeline_mode = #tpu.pipeline_mode<synchronous>, transform_indices = @transform_1, window_bounds = array<i64: 128, 128>}, {pipeline_mode = #tpu.pipeline_mode<synchronous>, transform_indices = @transform_2, window_bounds = array<i64: 128, 128>}, {pipeline_mode = #tpu.pipeline_mode<synchronous>, transform_indices = @transform_3, window_bounds = array<i64: 128, 128>}, {pipeline_mode = #tpu.pipeline_mode<synchronous>, transform_indices = @transform_4, window_bounds = array<i64: 1, 128>}, {pipeline_mode = #tpu.pipeline_mode<synchronous>, transform_indices = @transform_5, window_bounds = array<i64: 1, 128>}, {pipeline_mode = #tpu.pipeline_mode<synchronous>, transform_indices = @transform_6, window_bounds = array<i64: 1, 128>}, {transform_indices = @transform_7, window_bounds = array<i64: 1, 256, 128>}]} {
    %c0_i32 = arith.constant 0 : i32
    %0 = arith.cmpi eq, %arg1, %c0_i32 : i32
    %1 = arith.extui %0 : i1 to i32
    %c0_i32_0 = arith.constant 0 : i32
    %2 = arith.cmpi ne, %1, %c0_i32_0 : i32
    scf.if %2 {
      %c0_17 = arith.constant 0 : index
      %c0_18 = arith.constant 0 : index
      %c0_19 = arith.constant 0 : index
      %35 = vector.load %arg2[%c0_17, %c0_18, %c0_19] : memref<1x256x128xf32, #tpu.memory_space<vmem>>, vector<1x256x128xf32>
      %36 = vector.shape_cast %35 : vector<1x256x128xf32> to vector<256x128xf32>
      %37 = arith.truncf %36 : vector<256x128xf32> to vector<256x128xbf16>
      %c0_20 = arith.constant 0 : index
      %c0_21 = arith.constant 0 : index
      %38 = vector.load %arg4[%c0_20, %c0_21] : memref<128x128xbf16, #tpu.memory_space<vmem>>, vector<128x128xbf16>
      %cst_22 = arith.constant dense<0.000000e+00> : vector<256x128xf32>
      %39 = tpu.matmul %37, %38, %cst_22 {dimension_numbers = #tpu.dot_dimension_numbers<[1], [0], [0], [1], [0, 0, 1, 1], [], []>} : vector<256x128xbf16>, vector<128x128xbf16>, vector<256x128xf32> -> vector<256x128xf32>
      %c0_23 = arith.constant 0 : index
      %c0_24 = arith.constant 0 : index
      %40 = vector.load %arg7[%c0_23, %c0_24] : memref<1x128xf32, #tpu.memory_space<vmem>>, vector<1x128xf32>
      %41 = vector.broadcast %40 : vector<1x128xf32> to vector<256x128xf32>
      %42 = arith.addf %39, %41 : vector<256x128xf32>
      %43 = arith.truncf %42 : vector<256x128xf32> to vector<256x128xbf16>
      %c0_25 = arith.constant 0 : index
      %c0_26 = arith.constant 0 : index
      %44 = vector.load %arg10[%c0_25, %c0_26] : memref<256x128xbf16, #tpu.memory_space<vmem>>, vector<256x128xbf16>
      tpu.vector_store %arg10[%c0_25, %c0_26], %43 {strides = array<i32>} : memref<256x128xbf16, #tpu.memory_space<vmem>>, vector<256x128xbf16>,
      %c0_27 = arith.constant 0 : index
      %c0_28 = arith.constant 0 : index
      %45 = vector.load %arg5[%c0_27, %c0_28] : memref<128x128xbf16, #tpu.memory_space<vmem>>, vector<128x128xbf16>
      %cst_29 = arith.constant dense<0.000000e+00> : vector<256x128xf32>
      %46 = tpu.matmul %37, %45, %cst_29 {dimension_numbers = #tpu.dot_dimension_numbers<[1], [0], [0], [1], [0, 0, 1, 1], [], []>} : vector<256x128xbf16>, vector<128x128xbf16>, vector<256x128xf32> -> vector<256x128xf32>
      %c0_30 = arith.constant 0 : index
      %c0_31 = arith.constant 0 : index
      %47 = vector.load %arg8[%c0_30, %c0_31] : memref<1x128xf32, #tpu.memory_space<vmem>>, vector<1x128xf32>
      %48 = vector.broadcast %47 : vector<1x128xf32> to vector<256x128xf32>
      %49 = arith.addf %46, %48 : vector<256x128xf32>
      %50 = arith.truncf %49 : vector<256x128xf32> to vector<256x128xbf16>
      %c0_32 = arith.constant 0 : index
      %c0_33 = arith.constant 0 : index
      %51 = vector.load %arg11[%c0_32, %c0_33] : memref<256x128xbf16, #tpu.memory_space<vmem>>, vector<256x128xbf16>
      tpu.vector_store %arg11[%c0_32, %c0_33], %50 {strides = array<i32>} : memref<256x128xbf16, #tpu.memory_space<vmem>>, vector<256x128xbf16>,
    } else {
    }
    %c256_i32 = arith.constant 256 : i32
    %3 = arith.muli %arg1, %c256_i32 : i32
    %4 = tpu.assume_multiple %3, 256 : i32
    %c0 = arith.constant 0 : index
    %5 = arith.index_cast %4 : i32 to index
    %c0_1 = arith.constant 0 : index
    %6 = vector.load %arg2[%c0, %5, %c0_1] : memref<1x256x128xf32, #tpu.memory_space<vmem>>, vector<1x256x128xf32>
    %7 = vector.shape_cast %6 : vector<1x256x128xf32> to vector<256x128xf32>
    %8 = arith.truncf %7 : vector<256x128xf32> to vector<256x128xbf16>
    %c0_2 = arith.constant 0 : index
    %c0_3 = arith.constant 0 : index
    %9 = vector.load %arg3[%c0_2, %c0_3] : memref<128x128xbf16, #tpu.memory_space<vmem>>, vector<128x128xbf16>
    %cst = arith.constant dense<0.000000e+00> : vector<256x128xf32>
    %10 = tpu.matmul %8, %9, %cst {dimension_numbers = #tpu.dot_dimension_numbers<[1], [0], [0], [1], [0, 0, 1, 1], [], []>} : vector<256x128xbf16>, vector<128x128xbf16>, vector<256x128xf32> -> vector<256x128xf32>
    %c0_4 = arith.constant 0 : index
    %c0_5 = arith.constant 0 : index
    %11 = vector.load %arg6[%c0_4, %c0_5] : memref<1x128xf32, #tpu.memory_space<vmem>>, vector<1x128xf32>
    %12 = vector.broadcast %11 : vector<1x128xf32> to vector<256x128xf32>
    %13 = arith.addf %10, %12 : vector<256x128xf32>
    %14 = arith.truncf %13 : vector<256x128xf32> to vector<256x128xbf16>
    %c0_6 = arith.constant 0 : index
    %c0_7 = arith.constant 0 : index
    %15 = vector.load %arg10[%c0_6, %c0_7] : memref<256x128xbf16, #tpu.memory_space<vmem>>, vector<256x128xbf16>
    %cst_8 = arith.constant dense<0.000000e+00> : vector<256x256xf32>
    %16 = tpu.matmul %14, %15, %cst_8 {dimension_numbers = #tpu.dot_dimension_numbers<[1], [1], [0], [0], [0, 0, 1, 0], [], []>} : vector<256x128xbf16>, vector<256x128xbf16>, vector<256x256xf32> -> vector<256x256xf32>
    %cst_9 = arith.constant dense<0xFF800000> : vector<256xf32>
    %17 = vector.multi_reduction <maximumf>, %16, %cst_9 [1] : vector<256x256xf32> to vector<256xf32>
    %18 = vector.shape_cast %17 : vector<256xf32> to vector<256x1xf32>
    %19 = vector.broadcast %18 : vector<256x1xf32> to vector<256x256xf32>
    %20 = arith.subf %16, %19 : vector<256x256xf32>
    %21 = arith.truncf %20 : vector<256x256xf32> to vector<256x256xbf16>
    %22 = math.exp %21 : vector<256x256xbf16>
    %23 = arith.extf %22 : vector<256x256xbf16> to vector<256x256xf32>
    %cst_10 = arith.constant dense<0.000000e+00> : vector<256xf32>
    %24 = vector.multi_reduction <add>, %23, %cst_10 [1] : vector<256x256xf32> to vector<256xf32>
    %25 = vector.shape_cast %24 : vector<256xf32> to vector<256x1xf32>
    %c0_11 = arith.constant 0 : index
    %c0_12 = arith.constant 0 : index
    %26 = vector.load %arg11[%c0_11, %c0_12] : memref<256x128xbf16, #tpu.memory_space<vmem>>, vector<256x128xbf16>
    %cst_13 = arith.constant dense<0.000000e+00> : vector<256x128xf32>
    %27 = tpu.matmul %22, %26, %cst_13 {dimension_numbers = #tpu.dot_dimension_numbers<[1], [0], [0], [1], [0, 0, 1, 1], [], []>} : vector<256x256xbf16>, vector<256x128xbf16>, vector<256x128xf32> -> vector<256x128xf32>
    %28 = tpu.reciprocal %25 {approx = true} : vector<256x1xf32> -> vector<256x1xf32>
    %29 = vector.broadcast %28 : vector<256x1xf32> to vector<256x128xf32>
    %30 = arith.mulf %27, %29 : vector<256x128xf32>
    %31 = arith.addf %30, %7 : vector<256x128xf32>
    %c0_14 = arith.constant 0 : index
    %c0_15 = arith.constant 0 : index
    %c0_16 = arith.constant 0 : index
    %32 = vector.load %arg9[%c0_14, %c0_15, %c0_16] : memref<1x256x128xf32, #tpu.memory_space<vmem>>, vector<1x256x128xf32>
    %33 = vector.shape_cast %32 : vector<1x256x128xf32> to vector<256x128xf32>
    %34 = vector.shape_cast %31 : vector<256x128xf32> to vector<1x256x128xf32>
    tpu.vector_store %arg9[%c0_14, %c0_15, %c0_16], %34 {strides = array<i32>} : memref<1x256x128xf32, #tpu.memory_space<vmem>>, vector<1x256x128xf32>,
    return
  }
  func.func @transform_0(%arg0: i32, %arg1: i32) -> (i32, i32, i32) {
    %c0_i32 = arith.constant 0 : i32
    %c0_i32_0 = arith.constant 0 : i32
    %c0_i32_1 = arith.constant 0 : i32
    return %arg0, %c0_i32, %c0_i32_0 : i32, i32, i32
  }
  func.func @transform_1(%arg0: i32, %arg1: i32) -> (i32, i32) {
    %c0_i32 = arith.constant 0 : i32
    %c0_i32_0 = arith.constant 0 : i32
    %c0_i32_1 = arith.constant 0 : i32
    return %c0_i32, %c0_i32_0 : i32, i32
  }
  func.func @transform_2(%arg0: i32, %arg1: i32) -> (i32, i32) {
    %c0_i32 = arith.constant 0 : i32
    %c0_i32_0 = arith.constant 0 : i32
    %c0_i32_1 = arith.constant 0 : i32
    return %c0_i32, %c0_i32_0 : i32, i32
  }
  func.func @transform_3(%arg0: i32, %arg1: i32) -> (i32, i32) {
    %c0_i32 = arith.constant 0 : i32
    %c0_i32_0 = arith.constant 0 : i32
    %c0_i32_1 = arith.constant 0 : i32
    return %c0_i32, %c0_i32_0 : i32, i32
  }
  func.func @transform_4(%arg0: i32, %arg1: i32) -> (i32, i32) {
    %c0_i32 = arith.constant 0 : i32
    %c0_i32_0 = arith.constant 0 : i32
    %c0_i32_1 = arith.constant 0 : i32
    return %c0_i32, %c0_i32_0 : i32, i32
  }
  func.func @transform_5(%arg0: i32, %arg1: i32) -> (i32, i32) {
    %c0_i32 = arith.constant 0 : i32
    %c0_i32_0 = arith.constant 0 : i32
    %c0_i32_1 = arith.constant 0 : i32
    return %c0_i32, %c0_i32_0 : i32, i32
  }
  func.func @transform_6(%arg0: i32, %arg1: i32) -> (i32, i32) {
    %c0_i32 = arith.constant 0 : i32
    %c0_i32_0 = arith.constant 0 : i32
    %c0_i32_1 = arith.constant 0 : i32
    return %c0_i32, %c0_i32_0 : i32, i32
  }
  func.func @transform_7(%arg0: i32, %arg1: i32) -> (i32, i32, i32) {
    %c0_i32 = arith.constant 0 : i32
    %c0_i32_0 = arith.constant 0 : i32
    return %arg0, %arg1, %c0_i32 : i32, i32, i32
  }
}

</mosaic_0001>

<llo_original>
// kernel: tpu_custom_call.1
$region0: #{tpu_custom_call.1}
  #allocation0 [shape = 'u32[]', space=smem, size = 0x4, offset = 0x4, fixed_abs, tag = 'smem constant byte address 0x4 - core index']
  #allocation1 [shape = 'u32[144,128]{1,0:T(1,128)}', space=vmem, size = 0x12000, scoped, tag = 'internal scratch']
  #allocation2 [shape = 'bf16[256,128]{1,0:T(16,128)(2,1)}', space=vmem, size = 0x10000, scoped, tag = 'scratch operand']
  #allocation3 [shape = 'bf16[256,128]{1,0:T(16,128)(2,1)}', space=vmem, size = 0x10000, scoped, tag = 'scratch operand']
  %s0 = inlined_call_operand.hbm [shape: f32[2,256,128], index: 0, kind: input, shape index: {}]
  %s1 = inlined_call_operand.hbm [shape: bf16[128,128], index: 1, kind: input, shape index: {}]
  %s2 = inlined_call_operand.hbm [shape: bf16[128,128], index: 2, kind: input, shape index: {}]
  %s3 = inlined_call_operand.hbm [shape: bf16[128,128], index: 3, kind: input, shape index: {}]
  %s4 = inlined_call_operand.vmem [shape: f32[1,128], index: 4, kind: input, shape index: {}]
  %s5 = inlined_call_operand.vmem [shape: f32[1,128], index: 5, kind: input, shape index: {}]
  %s6 = inlined_call_operand.vmem [shape: f32[1,128], index: 6, kind: input, shape index: {}]
  %s7 = inlined_call_operand.hbm [shape: f32[2,256,128], index: 7, kind: output, shape index: {}]
  %s8 = sld [smem:[#allocation0]]
  $region81: #{tpu_custom_call.1} parent=0
    _
  %s10 = ssub.s32 1, %s8
  %s11 = scalar_select 0, %s10, %s8
  $region1: #{tpu_custom_call.1} parent=0
    #allocation4 [shape = 'u8[262144]{0}', space=vmem, size = 0x40000, scoped, tag = 'input window, operand 0']
    #allocation5 [shape = 's32[2]{0}', space=sflag, size = 0x8, scoped, tag = 'scoped memory for tpu_custom_call.1']
    #allocation6 [shape = 's32[2]{0}', space=sflag, size = 0x8, scoped, tag = 'scoped memory for tpu_custom_call.1']
    #allocation7 [shape = 'u8[32768]{0}', space=vmem, size = 0x8000, scoped, tag = 'input window, operand 1, single buffered']
    #allocation8 [shape = 's32[1]{0}', space=sflag, size = 0x4, scoped, tag = 'scoped memory for tpu_custom_call.1']
    #allocation9 [shape = 'u8[32768]{0}', space=vmem, size = 0x8000, scoped, tag = 'input window, operand 2, single buffered']
    #allocation10 [shape = 'u8[32768]{0}', space=vmem, size = 0x8000, scoped, tag = 'input window, operand 3, single buffered']
    #allocation11 [shape = 's32[1]{0}', space=sflag, size = 0x4, scoped, tag = 'scoped memory for tpu_custom_call.1']
    #allocation12 [shape = 'u8[262144]{0}', space=vmem, size = 0x40000, scoped, tag = 'output window, operand 0']
    %12 = vsyncpa [#allocation5], 0
    %s13 = scalar_lea.sflag [#allocation5], 1
    %14 = vsyncpa %s13, 0
    %15 = vsyncpa [#allocation8], 0
    %16 = vsyncpa [#allocation11], 0
    %17 = vsyncpa [#allocation6], 0
    %s18 = scalar_lea.sflag [#allocation6], 1
    %19 = vsyncpa %s18, 0
    loop: start=0, step=1, limit=4
    $region2: #{tpu_custom_call.1} parent=1 // loop_pre_header
      _
    $region3: #{tpu_custom_call.1} parent=1 // loop_header
      %s21 = sphi 0, %s25
      %p22 = scmp.ge.s32.totalorder %s21, 4
      %s28 = sphi 0, %s40
      %s29 = sphi 0, %s36
      %s30 = sphi 0, %s28
      %s31 = sphi 0, %s29
      %s32 = sphi 0, %s30
      %s33 = sphi 0, %s31
      %s43 = sphi 0, %s45
      %s46 = sphi 0, %s43
      %s47 = sphi 0, %s46
      %s63 = sphi 0, %s47
      %s67 = sphi 0, %s67
      %s69 = sphi 0, %s67
      %s70 = sphi 0, %s69
      %s84 = sphi 0, %s70
      %s88 = sphi 0, %s88
      %s90 = sphi 0, %s88
      %s91 = sphi 0, %s90
      %s105 = sphi 0, %s91
      %s109 = sphi 0, %s109
      %s111 = sphi 0, %s109
      %s112 = sphi 0, %s111
      %s126 = sphi 0, %s112
      %s130 = sphi 0, %s130
      %s132 = sphi 0, %s130
      %s133 = sphi 0, %s132
      %s147 = sphi 0, %s133
      %s151 = sphi 0, %s151
      %s153 = sphi 0, %s151
      %s154 = sphi 0, %s153
      %s168 = sphi 0, %s154
      %s172 = sphi 0, %s172
      %s174 = sphi 0, %s172
      %s175 = sphi 0, %s174
      %s189 = sphi 0, %s175
      %s197 = sphi 0, %s199
      %s200 = sphi 0, %s197
      %s201 = sphi 0, %s200
      %s217 = sphi 0, %s201
    $region4: #{tpu_custom_call.1} parent=1 // loop_header_branch
      %24 = sbr.rel (%p22) target = $region8
    $region5: #{tpu_custom_call.1} parent=1 // loop_body
      %s26 = ssub.s32 %s21, 1
      %s27 = ssub.s32 %s21, 2
      %s34 = sadd.s32 1, %s29
      %p35 = scmp.ge.s32.totalorder %s34, 1
      %s36 = scalar_select %p35, 0, %s34
      %s37 = sadd.s32 1, %s28
      %s38 = scalar_select %p35, %s37, %s28
      %p39 = scmp.ge.s32.totalorder %s38, 2
      %s40 = scalar_select %p39, 0, %s38
      %s41 = ssub.s32 %s28, %s40
      %p42 = scmp.eq.s32.totalorder %s41, 0
      %s44 = sadd.s32 %s43, 1
      %s45 = scalar_select %p42, %s43, %s44
      %p48 = pneg %p42
      %p49 = scmp.eq.s32.totalorder %s21, 1
      %p50 = por %p48, %p49
      %p51 = scmp.ne.s32.totalorder %s43, %s46
      %p52 = scmp.eq.s32.totalorder %s21, 0
      %p53 = por %p51, %p52
      %p54 = scmp.ne.s32.totalorder %s43, %s46
      %p55 = scmp.eq.s32.totalorder %s26, 1
      %p56 = por %p54, %p55
      %p57 = scmp.ne.s32.totalorder %s46, %s47
      %p58 = scmp.eq.s32.totalorder %s26, 0
      %p59 = por %p57, %p58
      %p60 = scmp.ne.s32.totalorder %s46, %s47
      %p61 = scmp.eq.s32.totalorder %s27, 1
      %p62 = por %p60, %p61
      %p64 = scmp.ne.s32.totalorder %s47, %s63
      %p65 = scmp.eq.s32.totalorder %s27, 0
      %p66 = por %p64, %p65
      %s68 = sadd.s32 %s67, 1
      %p71 = scmp.eq.s32.totalorder %s21, 1
      %p72 = scmp.ne.s32.totalorder %s67, %s69
      %p73 = scmp.eq.s32.totalorder %s21, 0
      %p74 = por %p72, %p73
      %p75 = scmp.ne.s32.totalorder %s67, %s69
      %p76 = scmp.eq.s32.totalorder %s26, 1
      %p77 = por %p75, %p76
      %p78 = scmp.ne.s32.totalorder %s69, %s70
      %p79 = scmp.eq.s32.totalorder %s26, 0
      %p80 = por %p78, %p79
      %p81 = scmp.ne.s32.totalorder %s69, %s70
      %p82 = scmp.eq.s32.totalorder %s27, 1
      %p83 = por %p81, %p82
      %p85 = scmp.ne.s32.totalorder %s70, %s84
      %p86 = scmp.eq.s32.totalorder %s27, 0
      %p87 = por %p85, %p86
      %s89 = sadd.s32 %s88, 1
      %p92 = scmp.eq.s32.totalorder %s21, 1
      %p93 = scmp.ne.s32.totalorder %s88, %s90
      %p94 = scmp.eq.s32.totalorder %s21, 0
      %p95 = por %p93, %p94
      %p96 = scmp.ne.s32.totalorder %s88, %s90
      %p97 = scmp.eq.s32.totalorder %s26, 1
      %p98 = por %p96, %p97
      %p99 = scmp.ne.s32.totalorder %s90, %s91
      %p100 = scmp.eq.s32.totalorder %s26, 0
      %p101 = por %p99, %p100
      %p102 = scmp.ne.s32.totalorder %s90, %s91
      %p103 = scmp.eq.s32.totalorder %s27, 1
      %p104 = por %p102, %p103
      %p106 = scmp.ne.s32.totalorder %s91, %s105
      %p107 = scmp.eq.s32.totalorder %s27, 0
      %p108 = por %p106, %p107
      %s110 = sadd.s32 %s109, 1
      %p113 = scmp.eq.s32.totalorder %s21, 1
      %p114 = scmp.ne.s32.totalorder %s109, %s111
      %p115 = scmp.eq.s32.totalorder %s21, 0
      %p116 = por %p114, %p115
      %p117 = scmp.ne.s32.totalorder %s109, %s111
      %p118 = scmp.eq.s32.totalorder %s26, 1
      %p119 = por %p117, %p118
      %p120 = scmp.ne.s32.totalorder %s111, %s112
      %p121 = scmp.eq.s32.totalorder %s26, 0
      %p122 = por %p120, %p121
      %p123 = scmp.ne.s32.totalorder %s111, %s112
      %p124 = scmp.eq.s32.totalorder %s27, 1
      %p125 = por %p123, %p124
      %p127 = scmp.ne.s32.totalorder %s112, %s126
      %p128 = scmp.eq.s32.totalorder %s27, 0
      %p129 = por %p127, %p128
      %s131 = sadd.s32 %s130, 1
      %p134 = scmp.eq.s32.totalorder %s21, 1
      %p135 = scmp.ne.s32.totalorder %s130, %s132
      %p136 = scmp.eq.s32.totalorder %s21, 0
      %p137 = por %p135, %p136
      %p138 = scmp.ne.s32.totalorder %s130, %s132
      %p139 = scmp.eq.s32.totalorder %s26, 1
      %p140 = por %p138, %p139
      %p141 = scmp.ne.s32.totalorder %s132, %s133
      %p142 = scmp.eq.s32.totalorder %s26, 0
      %p143 = por %p141, %p142
      %p144 = scmp.ne.s32.totalorder %s132, %s133
      %p145 = scmp.eq.s32.totalorder %s27, 1
      %p146 = por %p144, %p145
      %p148 = scmp.ne.s32.totalorder %s133, %s147
      %p149 = scmp.eq.s32.totalorder %s27, 0
      %p150 = por %p148, %p149
      %s152 = sadd.s32 %s151, 1
      %p155 = scmp.eq.s32.totalorder %s21, 1
      %p156 = scmp.ne.s32.totalorder %s151, %s153
      %p157 = scmp.eq.s32.totalorder %s21, 0
      %p158 = por %p156, %p157
      %p159 = scmp.ne.s32.totalorder %s151, %s153
      %p160 = scmp.eq.s32.totalorder %s26, 1
      %p161 = por %p159, %p160
      %p162 = scmp.ne.s32.totalorder %s153, %s154
      %p163 = scmp.eq.s32.totalorder %s26, 0
      %p164 = por %p162, %p163
      %p165 = scmp.ne.s32.totalorder %s153, %s154
      %p166 = scmp.eq.s32.totalorder %s27, 1
      %p167 = por %p165, %p166
      %p169 = scmp.ne.s32.totalorder %s154, %s168
      %p170 = scmp.eq.s32.totalorder %s27, 0
      %p171 = por %p169, %p170
      %s173 = sadd.s32 %s172, 1
      %p176 = scmp.eq.s32.totalorder %s21, 1
      %p177 = scmp.ne.s32.totalorder %s172, %s174
      %p178 = scmp.eq.s32.totalorder %s21, 0
      %p179 = por %p177, %p178
      %p180 = scmp.ne.s32.totalorder %s172, %s174
      %p181 = scmp.eq.s32.totalorder %s26, 1
      %p182 = por %p180, %p181
      %p183 = scmp.ne.s32.totalorder %s174, %s175
      %p184 = scmp.eq.s32.totalorder %s26, 0
      %p185 = por %p183, %p184
      %p186 = scmp.ne.s32.totalorder %s174, %s175
      %p187 = scmp.eq.s32.totalorder %s27, 1
      %p188 = por %p186, %p187
      %p190 = scmp.ne.s32.totalorder %s175, %s189
      %p191 = scmp.eq.s32.totalorder %s27, 0
      %p192 = por %p190, %p191
      %s193 = ssub.s32 %s28, %s40
      %s194 = ssub.s32 %s29, %s36
      %s195 = sor.u32 %s193, %s194
      %p196 = scmp.eq.s32.totalorder %s195, 0
      %s198 = sadd.s32 %s197, 1
      %s199 = scalar_select %p196, %s197, %s198
      %p202 = pneg %p196
      %p203 = scmp.eq.s32.totalorder %s21, 1
      %p204 = por %p202, %p203
      %p205 = scmp.ne.s32.totalorder %s197, %s200
      %p206 = scmp.eq.s32.totalorder %s21, 0
      %p207 = por %p205, %p206
      %p208 = scmp.ne.s32.totalorder %s197, %s200
      %p209 = scmp.eq.s32.totalorder %s26, 1
      %p210 = por %p208, %p209
      %p211 = scmp.ne.s32.totalorder %s200, %s201
      %p212 = scmp.eq.s32.totalorder %s26, 0
      %p213 = por %p211, %p212
      %p214 = scmp.ne.s32.totalorder %s200, %s201
      %p215 = scmp.eq.s32.totalorder %s27, 1
      %p216 = por %p214, %p215
      %p218 = scmp.ne.s32.totalorder %s201, %s217
      %p219 = scmp.eq.s32.totalorder %s27, 0
      %p220 = por %p218, %p219
      %p221 = scmp.le.s32.totalorder 1, %s21
      %p222 = scmp.lt.s32.totalorder %s21, 3
      %p223 = pnand %p221, %p222
      %p224 = pneg %p223
      // Predicated region
      $region9: #{tpu_custom_call.1} parent=5 // pred_check
        _
      $region10: #{tpu_custom_call.1} parent=5 // pred_check_branch
        %226 = sbr.rel (%p223) target = $region12
      $region11: #{tpu_custom_call.1} parent=5 // pred_region
        %s227 = ssub.s32 %s21, 1
        // Predicated region
        $region13: #{tpu_custom_call.1} parent=11 // pred_check
          %p228 = pneg %p80
        $region14: #{tpu_custom_call.1} parent=11 // pred_check_branch
          %230 = sbr.rel (%p228) target = $region16
        $region15: #{tpu_custom_call.1} parent=11 // pred_region
          %s232 = ssub.s32 1024, 1024
          %233 = vsyncadd [#allocation8], %s232
          %s234 = sshll.u32 [#allocation7], 4
          %s235 = int_to_ptr.vmem [resolvable:$true] %s234
          %240 = dma.hbm_to_vmem [thread:$0]  %s1, 1024, %s235, [#allocation8], 64, 64, 4
        $region16: #{tpu_custom_call.1} parent=11 // pred_fallthru
          _
        // Predicated region
        $region17: #{tpu_custom_call.1} parent=11 // pred_check
          %p241 = pneg %p101
        $region18: #{tpu_custom_call.1} parent=11 // pred_check_branch
          %243 = sbr.rel (%p241) target = $region20
        $region19: #{tpu_custom_call.1} parent=11 // pred_region
          %s245 = ssub.s32 1024, 1024
          %246 = vsyncadd [#allocation8], %s245
          %s247 = sshll.u32 [#allocation9], 4
          %s248 = int_to_ptr.vmem [resolvable:$true] %s247
          %253 = dma.hbm_to_vmem [thread:$0]  %s2, 1024, %s248, [#allocation8], 64, 64, 4
        $region20: #{tpu_custom_call.1} parent=11 // pred_fallthru
          _
        // Predicated region
        $region21: #{tpu_custom_call.1} parent=11 // pred_check
          %p254 = pneg %p122
        $region22: #{tpu_custom_call.1} parent=11 // pred_check_branch
          %256 = sbr.rel (%p254) target = $region24
        $region23: #{tpu_custom_call.1} parent=11 // pred_region
          %s258 = ssub.s32 1024, 1024
          %259 = vsyncadd [#allocation11], %s258
          %s260 = sshll.u32 [#allocation10], 4
          %s261 = int_to_ptr.vmem [resolvable:$true] %s260
          %266 = dma.hbm_to_vmem [thread:$0]  %s3, 1024, %s261, [#allocation11], 64, 64, 4
        $region24: #{tpu_custom_call.1} parent=11 // pred_fallthru
          _
        // Predicated region
        $region25: #{tpu_custom_call.1} parent=11 // pred_check
          %p267 = pneg %p143
        $region26: #{tpu_custom_call.1} parent=11 // pred_check_branch
          %269 = sbr.rel (%p267) target = $region28
        $region27: #{tpu_custom_call.1} parent=11 // pred_region
          _
        $region28: #{tpu_custom_call.1} parent=11 // pred_fallthru
          _
        // Predicated region
        $region29: #{tpu_custom_call.1} parent=11 // pred_check
          %p270 = pneg %p164
        $region30: #{tpu_custom_call.1} parent=11 // pred_check_branch
          %272 = sbr.rel (%p270) target = $region32
        $region31: #{tpu_custom_call.1} parent=11 // pred_region
          _
        $region32: #{tpu_custom_call.1} parent=11 // pred_fallthru
          _
        // Predicated region
        $region33: #{tpu_custom_call.1} parent=11 // pred_check
          %p273 = pneg %p185
        $region34: #{tpu_custom_call.1} parent=11 // pred_check_branch
          %275 = sbr.rel (%p273) target = $region36
        $region35: #{tpu_custom_call.1} parent=11 // pred_region
          _
        $region36: #{tpu_custom_call.1} parent=11 // pred_fallthru
          _
      $region12: #{tpu_custom_call.1} parent=5 // pred_fallthru
        _
      %p276 = scmp.lt.s32.totalorder %s21, 2
      // Predicated region
      $region37: #{tpu_custom_call.1} parent=5 // pred_check
        %p277 = pneg %p276
      $region38: #{tpu_custom_call.1} parent=5 // pred_check_branch
        %279 = sbr.rel (%p277) target = $region40
      $region39: #{tpu_custom_call.1} parent=5 // pred_region
        // Predicated region
        $region41: #{tpu_custom_call.1} parent=39 // pred_check
          %p280 = pneg %p53
        $region42: #{tpu_custom_call.1} parent=39 // pred_check_branch
          %282 = sbr.rel (%p280) target = $region44
        $region43: #{tpu_custom_call.1} parent=39 // pred_region
          %s283 = sand.u32 %s43, 1
          %s284 = scalar_lea.sflag [#allocation5], %s283
          %s285 = sand.u32 %s43, 1
          %s286 = smul.addr %s285, 256
          %s287 = scalar_lea.vmem [#allocation4], %s286
          %s289 = ssub.s32 4096, 4096
          %290 = vsyncadd %s284, %s289
          %s291 = smul.addr %s28, 32
          %s292 = smul.addr %s291, 128
          %s293 = scalar_lea.hbm %s0, %s292
          %s294 = sshll.u32 %s287, 4
          %s295 = int_to_ptr.vmem [resolvable:$true] %s294
          %300 = dma.hbm_to_vmem [thread:$0]  %s293, 4096, %s295, %s284, 128, 128, 8
        $region44: #{tpu_custom_call.1} parent=39 // pred_fallthru
          _
      $region40: #{tpu_custom_call.1} parent=5 // pred_fallthru
        _
      %p301 = scmp.le.s32.totalorder 1, %s21
      %p302 = scmp.lt.s32.totalorder %s21, 3
      %p303 = pnand %p301, %p302
      %p304 = pneg %p303
      // Predicated region
      $region45: #{tpu_custom_call.1} parent=5 // pred_check
        _
      $region46: #{tpu_custom_call.1} parent=5 // pred_check_branch
        %306 = sbr.rel (%p303) target = $region48
      $region47: #{tpu_custom_call.1} parent=5 // pred_region
        %s307 = ssub.s32 %s21, 1
        %s308 = sand.u32 %s46, 1
        %s309 = scalar_lea.sflag [#allocation5], %s308
        %s310 = sand.u32 %s46, 1
        %s311 = smul.addr %s310, 256
        %s312 = scalar_lea.vmem [#allocation4], %s311
        // Predicated region
        $region49: #{tpu_custom_call.1} parent=47 // pred_check
          %p313 = pneg %p59
        $region50: #{tpu_custom_call.1} parent=47 // pred_check_branch
          %315 = sbr.rel (%p313) target = $region52
        $region51: #{tpu_custom_call.1} parent=47 // pred_region
          %316 = dma.done %s309, 4096
        $region52: #{tpu_custom_call.1} parent=47 // pred_fallthru
          _
        // Predicated region
        $region53: #{tpu_custom_call.1} parent=47 // pred_check
          %p317 = pneg %p80
        $region54: #{tpu_custom_call.1} parent=47 // pred_check_branch
          %319 = sbr.rel (%p317) target = $region56
        $region55: #{tpu_custom_call.1} parent=47 // pred_region
          %320 = dma.done [#allocation8], 1024
        $region56: #{tpu_custom_call.1} parent=47 // pred_fallthru
          _
        // Predicated region
        $region57: #{tpu_custom_call.1} parent=47 // pred_check
          %p321 = pneg %p101
        $region58: #{tpu_custom_call.1} parent=47 // pred_check_branch
          %323 = sbr.rel (%p321) target = $region60
        $region59: #{tpu_custom_call.1} parent=47 // pred_region
          %324 = dma.done [#allocation8], 1024
        $region60: #{tpu_custom_call.1} parent=47 // pred_fallthru
          _
        // Predicated region
        $region61: #{tpu_custom_call.1} parent=47 // pred_check
          %p325 = pneg %p122
        $region62: #{tpu_custom_call.1} parent=47 // pred_check_branch
          %327 = sbr.rel (%p325) target = $region64
        $region63: #{tpu_custom_call.1} parent=47 // pred_region
          %328 = dma.done [#allocation11], 1024
        $region64: #{tpu_custom_call.1} parent=47 // pred_fallthru
          _
        %s329 = sand.u32 %s46, 1
        %s330 = scalar_lea.sflag [#allocation5], %s329
        %s331 = sand.u32 %s46, 1
        %s332 = smul.addr %s331, 256
        %s333 = scalar_lea.vmem [#allocation4], %s332
        %p334 = pneg %p59
        %p335 = pneg %p56
        %p336 = pneg %p80
        %p337 = pneg %p77
        %p338 = pneg %p101
        %p339 = pneg %p98
        %p340 = pneg %p122
        %p341 = pneg %p119
        %p342 = pneg %p143
        %p343 = pneg %p140
        %p344 = pneg %p164
        %p345 = pneg %p161
        %p346 = pneg %p185
        %p347 = pneg %p182
        %p348 = pneg %p213
        %p349 = pneg %p210
        %s350 = sand.u32 %s200, 1
        %s351 = scalar_lea.sflag [#allocation6], %s350
        %s352 = sand.u32 %s200, 1
        %s353 = smul.addr %s352, 256
        %s354 = scalar_lea.vmem [#allocation12], %s353
        %s355 = smul.u32 32, %s31
        %p357 = scmp.eq.s32.totalorder %s31, 0
        // Predicated region
        $region65: #{tpu_custom_call.1} parent=47 // pred_check
          %p358 = pneg %p357
        $region66: #{tpu_custom_call.1} parent=47 // pred_check_branch
          %360 = sbr.rel (%p358) target = $region68
        $region67: #{tpu_custom_call.1} parent=47 // pred_region
          %v361 = vld [vmem:[%s312] sm:$0xff]
          %v362 = vld [vmem:[%s312 + $0x8] sm:$0xff]
          %v363 = vld [vmem:[%s312 + $0x10] sm:$0xff]
          %v364 = vld [vmem:[%s312 + $0x18] sm:$0xff]
          %v365 = vld [vmem:[%s312 + $0x20] sm:$0xff]
          %v366 = vld [vmem:[%s312 + $0x28] sm:$0xff]
          %v367 = vld [vmem:[%s312 + $0x30] sm:$0xff]
          %v368 = vld [vmem:[%s312 + $0x38] sm:$0xff]
          %v369 = vld [vmem:[%s312 + $0x40] sm:$0xff]
          %v370 = vld [vmem:[%s312 + $0x48] sm:$0xff]
          %v371 = vld [vmem:[%s312 + $0x50] sm:$0xff]
          %v372 = vld [vmem:[%s312 + $0x58] sm:$0xff]
          %v373 = vld [vmem:[%s312 + $0x60] sm:$0xff]
          %v374 = vld [vmem:[%s312 + $0x68] sm:$0xff]
          %v375 = vld [vmem:[%s312 + $0x70] sm:$0xff]
          %v376 = vld [vmem:[%s312 + $0x78] sm:$0xff]
          %v377 = vld [vmem:[%s312 + $0x80] sm:$0xff]
          %v378 = vld [vmem:[%s312 + $0x88] sm:$0xff]
          %v379 = vld [vmem:[%s312 + $0x90] sm:$0xff]
          %v380 = vld [vmem:[%s312 + $0x98] sm:$0xff]
          %v381 = vld [vmem:[%s312 + $0xa0] sm:$0xff]
          %v382 = vld [vmem:[%s312 + $0xa8] sm:$0xff]
          %v383 = vld [vmem:[%s312 + $0xb0] sm:$0xff]
          %v384 = vld [vmem:[%s312 + $0xb8] sm:$0xff]
          %v385 = vld [vmem:[%s312 + $0xc0] sm:$0xff]
          %v386 = vld [vmem:[%s312 + $0xc8] sm:$0xff]
          %v387 = vld [vmem:[%s312 + $0xd0] sm:$0xff]
          %v388 = vld [vmem:[%s312 + $0xd8] sm:$0xff]
          %v389 = vld [vmem:[%s312 + $0xe0] sm:$0xff]
          %v390 = vld [vmem:[%s312 + $0xe8] sm:$0xff]
          %v391 = vld [vmem:[%s312 + $0xf0] sm:$0xff]
          %v392 = vld [vmem:[%s312 + $0xf8] sm:$0xff]
          %v393 = vpack.c.bf16 %v362, %v361
          %v394 = vpack.c.bf16 %v364, %v363
          %v395 = vpack.c.bf16 %v366, %v365
          %v396 = vpack.c.bf16 %v368, %v367
          %v397 = vpack.c.bf16 %v370, %v369
          %v398 = vpack.c.bf16 %v372, %v371
          %v399 = vpack.c.bf16 %v374, %v373
          %v400 = vpack.c.bf16 %v376, %v375
          %v401 = vpack.c.bf16 %v378, %v377
          %v402 = vpack.c.bf16 %v380, %v379
          %v403 = vpack.c.bf16 %v382, %v381
          %v404 = vpack.c.bf16 %v384, %v383
          %v405 = vpack.c.bf16 %v386, %v385
          %v406 = vpack.c.bf16 %v388, %v387
          %v407 = vpack.c.bf16 %v390, %v389
          %v408 = vpack.c.bf16 %v392, %v391
          %v409 = vld [vmem:[#allocation9] sm:$0xf]
          %v410 = vld [vmem:[#allocation9 + $0x4] sm:$0xf]
          %v411 = vld [vmem:[#allocation9 + $0x8] sm:$0xf]
          %v412 = vld [vmem:[#allocation9 + $0xc] sm:$0xf]
          %v413 = vld [vmem:[#allocation9 + $0x10] sm:$0xf]
          %v414 = vld [vmem:[#allocation9 + $0x14] sm:$0xf]
          %v415 = vld [vmem:[#allocation9 + $0x18] sm:$0xf]
          %v416 = vld [vmem:[#allocation9 + $0x1c] sm:$0xf]
          %v417 = vld [vmem:[#allocation9 + $0x20] sm:$0xf]
          %v418 = vld [vmem:[#allocation9 + $0x24] sm:$0xf]
          %v419 = vld [vmem:[#allocation9 + $0x28] sm:$0xf]
          %v420 = vld [vmem:[#allocation9 + $0x2c] sm:$0xf]
          %v421 = vld [vmem:[#allocation9 + $0x30] sm:$0xf]
          %v422 = vld [vmem:[#allocation9 + $0x34] sm:$0xf]
          %v423 = vld [vmem:[#allocation9 + $0x38] sm:$0xf]
          %v424 = vld [vmem:[#allocation9 + $0x3c] sm:$0xf]
          %v425 = vld [vmem:[%s5] sm:$0x1]
          %v427 = vlaneseq
          %v428 = vshrl.u32 %v427, 7
          %v429 = vsub.s32 0, %v428
          %v430 = vrot.slane %v425, %v429
          %v448 = vunpack.c.l.b16 %v409
          %v449 = vunpack.c.l.b16 %v410
          %v450 = vunpack.c.l.b16 %v411
          %v451 = vunpack.c.l.b16 %v412
          %v452 = vunpack.c.l.b16 %v413
          %v453 = vunpack.c.l.b16 %v414
          %v454 = vunpack.c.l.b16 %v415
          %v455 = vunpack.c.l.b16 %v416
          %v456 = vunpack.c.l.b16 %v417
          %v457 = vunpack.c.l.b16 %v418
          %v458 = vunpack.c.l.b16 %v419
          %v459 = vunpack.c.l.b16 %v420
          %v460 = vunpack.c.l.b16 %v421
          %v461 = vunpack.c.l.b16 %v422
          %v462 = vunpack.c.l.b16 %v423
          %v463 = vunpack.c.l.b16 %v424
          %v464 = vpack.c.b16 %v449, %v448
          %v465 = vpack.c.b16 %v451, %v450
          %v466 = vpack.c.b16 %v453, %v452
          %v467 = vpack.c.b16 %v455, %v454
          %v468 = vpack.c.b16 %v457, %v456
          %v469 = vpack.c.b16 %v459, %v458
          %v470 = vpack.c.b16 %v461, %v460
          %v471 = vpack.c.b16 %v463, %v462
          %480 = vmatprep.subr.bf16.mxu0 0
          %481 = vmatpush1.bf16.msra.mxu0 %v464
          %482 = vmatprep.subr.bf16.mxu0 0
          %483 = vmatpush1.bf16.msra.mxu0 %v465
          %484 = vmatprep.subr.bf16.mxu0 0
          %485 = vmatpush1.bf16.msra.mxu0 %v466
          %486 = vmatprep.subr.bf16.mxu0 0
          %487 = vmatpush1.bf16.msra.mxu0 %v467
          %488 = vmatprep.subr.bf16.mxu0 0
          %489 = vmatpush1.bf16.msra.mxu0 %v468
          %490 = vmatprep.subr.bf16.mxu0 0
          %491 = vmatpush1.bf16.msra.mxu0 %v469
          %492 = vmatprep.subr.bf16.mxu0 0
          %493 = vmatpush1.bf16.msra.mxu0 %v470
          %494 = vmatprep.subr.bf16.mxu0 0
          %495 = vmatpush1.bf16.msra.mxu0 %v471
          %496 = vmatprep.subr.bf16.mxu0 0
          %497 = vmatpush1.bf16.msra.mxu0 0
          %498 = vmatprep.subr.bf16.mxu0 0
          %499 = vmatpush1.bf16.msra.mxu0 0
          %500 = vmatprep.subr.bf16.mxu0 0
          %501 = vmatpush1.bf16.msra.mxu0 0
          %502 = vmatprep.subr.bf16.mxu0 0
          %503 = vmatpush1.bf16.msra.mxu0 0
          %504 = vmatprep.subr.bf16.mxu0 0
          %505 = vmatpush1.bf16.msra.mxu0 0
          %506 = vmatprep.subr.bf16.mxu0 0
          %507 = vmatpush1.bf16.msra.mxu0 0
          %508 = vmatprep.subr.bf16.mxu0 0
          %509 = vmatpush1.bf16.msra.mxu0 0
          %510 = vmatprep.subr.bf16.mxu0 0
          %511 = vmatpush1.bf16.msra.mxu0 0
          %512 = vmatprep.mubr.bf16.mxu0 0
          %513 = vmatmul.mubr.bf16.gmra.mrb[0].mxu0 %v393
          %v514 = vpop.f32.mrb[0].mxu0
          %v515 = vadd.f32 %v430, %v514
          %v516 = vpop.f32.mrb[0].mxu0
          %v517 = vpop.f32.mrb[0].mxu0
          %v518 = vadd.f32 %v430, %v517
          %v519 = vpop.f32.mrb[0].mxu0
          %520 = vmatprep.mubr.bf16.mxu0 0
          %521 = vmatmul.mubr.bf16.gmra.mrb[0].mxu0 %v394
          %v522 = vpop.f32.mrb[0].mxu0
          %v523 = vadd.f32 %v430, %v522
          %v524 = vpop.f32.mrb[0].mxu0
          %v525 = vpop.f32.mrb[0].mxu0
          %v526 = vadd.f32 %v430, %v525
          %v527 = vpop.f32.mrb[0].mxu0
          %528 = vmatprep.mubr.bf16.mxu0 0
          %529 = vmatmul.mubr.bf16.gmra.mrb[0].mxu0 %v395
          %v530 = vpop.f32.mrb[0].mxu0
          %v531 = vadd.f32 %v430, %v530
          %v532 = vpop.f32.mrb[0].mxu0
          %v533 = vpop.f32.mrb[0].mxu0
          %v534 = vadd.f32 %v430, %v533
          %v535 = vpop.f32.mrb[0].mxu0
          %536 = vmatprep.mubr.bf16.mxu0 0
          %537 = vmatmul.mubr.bf16.gmra.mrb[0].mxu0 %v396
          %v538 = vpop.f32.mrb[0].mxu0
          %v539 = vadd.f32 %v430, %v538
          %v540 = vpop.f32.mrb[0].mxu0
          %v541 = vpop.f32.mrb[0].mxu0
          %v542 = vadd.f32 %v430, %v541
          %v543 = vpop.f32.mrb[0].mxu0
          %544 = vmatprep.mubr.bf16.mxu0 0
          %545 = vmatmul.mubr.bf16.gmra.mrb[0].mxu0 %v397
          %v546 = vpop.f32.mrb[0].mxu0
          %v547 = vadd.f32 %v430, %v546
          %v548 = vpop.f32.mrb[0].mxu0
          %v549 = vpop.f32.mrb[0].mxu0
          %v550 = vadd.f32 %v430, %v549
          %v551 = vpop.f32.mrb[0].mxu0
          %552 = vmatprep.mubr.bf16.mxu0 0
          %553 = vmatmul.mubr.bf16.gmra.mrb[0].mxu0 %v398
          %v554 = vpop.f32.mrb[0].mxu0
          %v555 = vadd.f32 %v430, %v554
          %v556 = vpop.f32.mrb[0].mxu0
          %v557 = vpop.f32.mrb[0].mxu0
          %v558 = vadd.f32 %v430, %v557
          %v559 = vpop.f32.mrb[0].mxu0
          %560 = vmatprep.mubr.bf16.mxu0 0
          %561 = vmatmul.mubr.bf16.gmra.mrb[0].mxu0 %v399
          %v562 = vpop.f32.mrb[0].mxu0
          %v563 = vadd.f32 %v430, %v562
          %v564 = vpop.f32.mrb[0].mxu0
          %v565 = vpop.f32.mrb[0].mxu0
          %v566 = vadd.f32 %v430, %v565
          %v567 = vpop.f32.mrb[0].mxu0
          %568 = vmatprep.mubr.bf16.mxu0 0
          %569 = vmatmul.mubr.bf16.gmra.mrb[0].mxu0 %v400
          %v570 = vpop.f32.mrb[0].mxu0
          %v571 = vadd.f32 %v430, %v570
          %v572 = vpop.f32.mrb[0].mxu0
          %v573 = vpop.f32.mrb[0].mxu0
          %v574 = vadd.f32 %v430, %v573
          %v575 = vpop.f32.mrb[0].mxu0
          %576 = vmatprep.mubr.bf16.mxu0 0
          %577 = vmatmul.mubr.bf16.gmra.mrb[0].mxu0 %v401
          %v578 = vpop.f32.mrb[0].mxu0
          %v579 = vadd.f32 %v430, %v578
          %v580 = vpop.f32.mrb[0].mxu0
          %v581 = vpop.f32.mrb[0].mxu0
          %v582 = vadd.f32 %v430, %v581
          %v583 = vpop.f32.mrb[0].mxu0
          %584 = vmatprep.mubr.bf16.mxu0 0
          %585 = vmatmul.mubr.bf16.gmra.mrb[0].mxu0 %v402
          %v586 = vpop.f32.mrb[0].mxu0
          %v587 = vadd.f32 %v430, %v586
          %v588 = vpop.f32.mrb[0].mxu0
          %v589 = vpop.f32.mrb[0].mxu0
          %v590 = vadd.f32 %v430, %v589
          %v591 = vpop.f32.mrb[0].mxu0
          %592 = vmatprep.mubr.bf16.mxu0 0
          %593 = vmatmul.mubr.bf16.gmra.mrb[0].mxu0 %v403
          %v594 = vpop.f32.mrb[0].mxu0
          %v595 = vadd.f32 %v430, %v594
          %v596 = vpop.f32.mrb[0].mxu0
          %v597 = vpop.f32.mrb[0].mxu0
          %v598 = vadd.f32 %v430, %v597
          %v599 = vpop.f32.mrb[0].mxu0
          %600 = vmatprep.mubr.bf16.mxu0 0
          %601 = vmatmul.mubr.bf16.gmra.mrb[0].mxu0 %v404
          %v602 = vpop.f32.mrb[0].mxu0
          %v603 = vadd.f32 %v430, %v602
          %v604 = vpop.f32.mrb[0].mxu0
          %v605 = vpop.f32.mrb[0].mxu0
          %v606 = vadd.f32 %v430, %v605
          %v607 = vpop.f32.mrb[0].mxu0
          %608 = vmatprep.mubr.bf16.mxu0 0
          %609 = vmatmul.mubr.bf16.gmra.mrb[0].mxu0 %v405
          %v610 = vpop.f32.mrb[0].mxu0
          %v611 = vadd.f32 %v430, %v610
          %v612 = vpop.f32.mrb[0].mxu0
          %v613 = vpop.f32.mrb[0].mxu0
          %v614 = vadd.f32 %v430, %v613
          %v615 = vpop.f32.mrb[0].mxu0
          %616 = vmatprep.mubr.bf16.mxu0 0
          %617 = vmatmul.mubr.bf16.gmra.mrb[0].mxu0 %v406
          %v618 = vpop.f32.mrb[0].mxu0
          %v619 = vadd.f32 %v430, %v618
          %v620 = vpop.f32.mrb[0].mxu0
          %v621 = vpop.f32.mrb[0].mxu0
          %v622 = vadd.f32 %v430, %v621
          %v623 = vpop.f32.mrb[0].mxu0
          %624 = vmatprep.mubr.bf16.mxu0 0
          %625 = vmatmul.mubr.bf16.gmra.mrb[0].mxu0 %v407
          %v626 = vpop.f32.mrb[0].mxu0
          %v627 = vadd.f32 %v430, %v626
          %v628 = vpop.f32.mrb[0].mxu0
          %v629 = vpop.f32.mrb[0].mxu0
          %v630 = vadd.f32 %v430, %v629
          %v631 = vpop.f32.mrb[0].mxu0
          %632 = vmatprep.mubr.bf16.mxu0 0
          %633 = vmatmul.mubr.bf16.gmra.mrb[0].mxu0 %v408
          %v634 = vpop.f32.mrb[0].mxu0
          %v635 = vadd.f32 %v430, %v634
          %v636 = vpop.f32.mrb[0].mxu0
          %v637 = vpop.f32.mrb[0].mxu0
          %v638 = vadd.f32 %v430, %v637
          %v639 = vpop.f32.mrb[0].mxu0
          %640 = vdwg.mxu0
          %v641 = vpack.c.bf16 %v518, %v515
          %v642 = vpack.c.bf16 %v526, %v523
          %v643 = vpack.c.bf16 %v534, %v531
          %v644 = vpack.c.bf16 %v542, %v539
          %v645 = vpack.c.bf16 %v550, %v547
          %v646 = vpack.c.bf16 %v558, %v555
          %v647 = vpack.c.bf16 %v566, %v563
          %v648 = vpack.c.bf16 %v574, %v571
          %v649 = vpack.c.bf16 %v582, %v579
          %v650 = vpack.c.bf16 %v590, %v587
          %v651 = vpack.c.bf16 %v598, %v595
          %v652 = vpack.c.bf16 %v606, %v603
          %v653 = vpack.c.bf16 %v614, %v611
          %v654 = vpack.c.bf16 %v622, %v619
          %v655 = vpack.c.bf16 %v630, %v627
          %v656 = vpack.c.bf16 %v638, %v635
          %657 = vst [vmem:[#allocation2] sm:$0xff] %v641
          %658 = vst [vmem:[#allocation2 + $0x8] sm:$0xff] %v642
          %659 = vst [vmem:[#allocation2 + $0x10] sm:$0xff] %v643
          %660 = vst [vmem:[#allocation2 + $0x18] sm:$0xff] %v644
          %661 = vst [vmem:[#allocation2 + $0x20] sm:$0xff] %v645
          %662 = vst [vmem:[#allocation2 + $0x28] sm:$0xff] %v646
          %663 = vst [vmem:[#allocation2 + $0x30] sm:$0xff] %v647
          %664 = vst [vmem:[#allocation2 + $0x38] sm:$0xff] %v648
          %665 = vst [vmem:[#allocation2 + $0x40] sm:$0xff] %v649
          %666 = vst [vmem:[#allocation2 + $0x48] sm:$0xff] %v650
          %667 = vst [vmem:[#allocation2 + $0x50] sm:$0xff] %v651
          %668 = vst [vmem:[#allocation2 + $0x58] sm:$0xff] %v652
          %669 = vst [vmem:[#allocation2 + $0x60] sm:$0xff] %v653
          %670 = vst [vmem:[#allocation2 + $0x68] sm:$0xff] %v654
          %671 = vst [vmem:[#allocation2 + $0x70] sm:$0xff] %v655
          %672 = vst [vmem:[#allocation2 + $0x78] sm:$0xff] %v656
          %v673 = vld [vmem:[#allocation10] sm:$0xf]
          %v674 = vld [vmem:[#allocation10 + $0x4] sm:$0xf]
          %v675 = vld [vmem:[#allocation10 + $0x8] sm:$0xf]
          %v676 = vld [vmem:[#allocation10 + $0xc] sm:$0xf]
          %v677 = vld [vmem:[#allocation10 + $0x10] sm:$0xf]
          %v678 = vld [vmem:[#allocation10 + $0x14] sm:$0xf]
          %v679 = vld [vmem:[#allocation10 + $0x18] sm:$0xf]
          %v680 = vld [vmem:[#allocation10 + $0x1c] sm:$0xf]
          %v681 = vld [vmem:[#allocation10 + $0x20] sm:$0xf]
          %v682 = vld [vmem:[#allocation10 + $0x24] sm:$0xf]
          %v683 = vld [vmem:[#allocation10 + $0x28] sm:$0xf]
          %v684 = vld [vmem:[#allocation10 + $0x2c] sm:$0xf]
          %v685 = vld [vmem:[#allocation10 + $0x30] sm:$0xf]
          %v686 = vld [vmem:[#allocation10 + $0x34] sm:$0xf]
          %v687 = vld [vmem:[#allocation10 + $0x38] sm:$0xf]
          %v688 = vld [vmem:[#allocation10 + $0x3c] sm:$0xf]
          %v689 = vld [vmem:[%s6] sm:$0x1]
          %v691 = vlaneseq
          %v692 = vshrl.u32 %v691, 7
          %v693 = vsub.s32 0, %v692
          %v694 = vrot.slane %v689, %v693
          %v712 = vunpack.c.l.b16 %v673
          %v713 = vunpack.c.l.b16 %v674
          %v714 = vunpack.c.l.b16 %v675
          %v715 = vunpack.c.l.b16 %v676
          %v716 = vunpack.c.l.b16 %v677
          %v717 = vunpack.c.l.b16 %v678
          %v718 = vunpack.c.l.b16 %v679
          %v719 = vunpack.c.l.b16 %v680
          %v720 = vunpack.c.l.b16 %v681
          %v721 = vunpack.c.l.b16 %v682
          %v722 = vunpack.c.l.b16 %v683
          %v723 = vunpack.c.l.b16 %v684
          %v724 = vunpack.c.l.b16 %v685
          %v725 = vunpack.c.l.b16 %v686
          %v726 = vunpack.c.l.b16 %v687
          %v727 = vunpack.c.l.b16 %v688
          %v728 = vpack.c.b16 %v713, %v712
          %v729 = vpack.c.b16 %v715, %v714
          %v730 = vpack.c.b16 %v717, %v716
          %v731 = vpack.c.b16 %v719, %v718
          %v732 = vpack.c.b16 %v721, %v720
          %v733 = vpack.c.b16 %v723, %v722
          %v734 = vpack.c.b16 %v725, %v724
          %v735 = vpack.c.b16 %v727, %v726
          %744 = vmatprep.subr.bf16.mxu0 0
          %745 = vmatpush1.bf16.msra.mxu0 %v728
          %746 = vmatprep.subr.bf16.mxu0 0
          %747 = vmatpush1.bf16.msra.mxu0 %v729
          %748 = vmatprep.subr.bf16.mxu0 0
          %749 = vmatpush1.bf16.msra.mxu0 %v730
          %750 = vmatprep.subr.bf16.mxu0 0
          %751 = vmatpush1.bf16.msra.mxu0 %v731
          %752 = vmatprep.subr.bf16.mxu0 0
          %753 = vmatpush1.bf16.msra.mxu0 %v732
          %754 = vmatprep.subr.bf16.mxu0 0
          %755 = vmatpush1.bf16.msra.mxu0 %v733
          %756 = vmatprep.subr.bf16.mxu0 0
          %757 = vmatpush1.bf16.msra.mxu0 %v734
          %758 = vmatprep.subr.bf16.mxu0 0
          %759 = vmatpush1.bf16.msra.mxu0 %v735
          %760 = vmatprep.subr.bf16.mxu0 0
          %761 = vmatpush1.bf16.msra.mxu0 0
          %762 = vmatprep.subr.bf16.mxu0 0
          %763 = vmatpush1.bf16.msra.mxu0 0
          %764 = vmatprep.subr.bf16.mxu0 0
          %765 = vmatpush1.bf16.msra.mxu0 0
          %766 = vmatprep.subr.bf16.mxu0 0
          %767 = vmatpush1.bf16.msra.mxu0 0
          %768 = vmatprep.subr.bf16.mxu0 0
          %769 = vmatpush1.bf16.msra.mxu0 0
          %770 = vmatprep.subr.bf16.mxu0 0
          %771 = vmatpush1.bf16.msra.mxu0 0
          %772 = vmatprep.subr.bf16.mxu0 0
          %773 = vmatpush1.bf16.msra.mxu0 0
          %774 = vmatprep.subr.bf16.mxu0 0
          %775 = vmatpush1.bf16.msra.mxu0 0
          %776 = vmatprep.mubr.bf16.mxu0 0
          %777 = vmatmul.mubr.bf16.gmra.mrb[0].mxu0 %v393
          %v778 = vpop.f32.mrb[0].mxu0
          %v779 = vadd.f32 %v694, %v778
          %v780 = vpop.f32.mrb[0].mxu0
          %v781 = vpop.f32.mrb[0].mxu0
          %v782 = vadd.f32 %v694, %v781
          %v783 = vpop.f32.mrb[0].mxu0
          %784 = vmatprep.mubr.bf16.mxu0 0
          %785 = vmatmul.mubr.bf16.gmra.mrb[0].mxu0 %v394
          %v786 = vpop.f32.mrb[0].mxu0
          %v787 = vadd.f32 %v694, %v786
          %v788 = vpop.f32.mrb[0].mxu0
          %v789 = vpop.f32.mrb[0].mxu0
          %v790 = vadd.f32 %v694, %v789
          %v791 = vpop.f32.mrb[0].mxu0
          %792 = vmatprep.mubr.bf16.mxu0 0
          %793 = vmatmul.mubr.bf16.gmra.mrb[0].mxu0 %v395
          %v794 = vpop.f32.mrb[0].mxu0
          %v795 = vadd.f32 %v694, %v794
          %v796 = vpop.f32.mrb[0].mxu0
          %v797 = vpop.f32.mrb[0].mxu0
          %v798 = vadd.f32 %v694, %v797
          %v799 = vpop.f32.mrb[0].mxu0
          %800 = vmatprep.mubr.bf16.mxu0 0
          %801 = vmatmul.mubr.bf16.gmra.mrb[0].mxu0 %v396
          %v802 = vpop.f32.mrb[0].mxu0
          %v803 = vadd.f32 %v694, %v802
          %v804 = vpop.f32.mrb[0].mxu0
          %v805 = vpop.f32.mrb[0].mxu0
          %v806 = vadd.f32 %v694, %v805
          %v807 = vpop.f32.mrb[0].mxu0
          %808 = vmatprep.mubr.bf16.mxu0 0
          %809 = vmatmul.mubr.bf16.gmra.mrb[0].mxu0 %v397
          %v810 = vpop.f32.mrb[0].mxu0
          %v811 = vadd.f32 %v694, %v810
          %v812 = vpop.f32.mrb[0].mxu0
          %v813 = vpop.f32.mrb[0].mxu0
          %v814 = vadd.f32 %v694, %v813
          %v815 = vpop.f32.mrb[0].mxu0
          %816 = vmatprep.mubr.bf16.mxu0 0
          %817 = vmatmul.mubr.bf16.gmra.mrb[0].mxu0 %v398
          %v818 = vpop.f32.mrb[0].mxu0
          %v819 = vadd.f32 %v694, %v818
          %v820 = vpop.f32.mrb[0].mxu0
          %v821 = vpop.f32.mrb[0].mxu0
          %v822 = vadd.f32 %v694, %v821
          %v823 = vpop.f32.mrb[0].mxu0
          %824 = vmatprep.mubr.bf16.mxu0 0
          %825 = vmatmul.mubr.bf16.gmra.mrb[0].mxu0 %v399
          %v826 = vpop.f32.mrb[0].mxu0
          %v827 = vadd.f32 %v694, %v826
          %v828 = vpop.f32.mrb[0].mxu0
          %v829 = vpop.f32.mrb[0].mxu0
          %v830 = vadd.f32 %v694, %v829
          %v831 = vpop.f32.mrb[0].mxu0
          %832 = vmatprep.mubr.bf16.mxu0 0
          %833 = vmatmul.mubr.bf16.gmra.mrb[0].mxu0 %v400
          %v834 = vpop.f32.mrb[0].mxu0
          %v835 = vadd.f32 %v694, %v834
          %v836 = vpop.f32.mrb[0].mxu0
          %v837 = vpop.f32.mrb[0].mxu0
          %v838 = vadd.f32 %v694, %v837
          %v839 = vpop.f32.mrb[0].mxu0
          %840 = vmatprep.mubr.bf16.mxu0 0
          %841 = vmatmul.mubr.bf16.gmra.mrb[0].mxu0 %v401
          %v842 = vpop.f32.mrb[0].mxu0
          %v843 = vadd.f32 %v694, %v842
          %v844 = vpop.f32.mrb[0].mxu0
          %v845 = vpop.f32.mrb[0].mxu0
          %v846 = vadd.f32 %v694, %v845
          %v847 = vpop.f32.mrb[0].mxu0
          %848 = vmatprep.mubr.bf16.mxu0 0
          %849 = vmatmul.mubr.bf16.gmra.mrb[0].mxu0 %v402
          %v850 = vpop.f32.mrb[0].mxu0
          %v851 = vadd.f32 %v694, %v850
          %v852 = vpop.f32.mrb[0].mxu0
          %v853 = vpop.f32.mrb[0].mxu0
          %v854 = vadd.f32 %v694, %v853
          %v855 = vpop.f32.mrb[0].mxu0
          %856 = vmatprep.mubr.bf16.mxu0 0
          %857 = vmatmul.mubr.bf16.gmra.mrb[0].mxu0 %v403
          %v858 = vpop.f32.mrb[0].mxu0
          %v859 = vadd.f32 %v694, %v858
          %v860 = vpop.f32.mrb[0].mxu0
          %v861 = vpop.f32.mrb[0].mxu0
          %v862 = vadd.f32 %v694, %v861
          %v863 = vpop.f32.mrb[0].mxu0
          %864 = vmatprep.mubr.bf16.mxu0 0
          %865 = vmatmul.mubr.bf16.gmra.mrb[0].mxu0 %v404
          %v866 = vpop.f32.mrb[0].mxu0
          %v867 = vadd.f32 %v694, %v866
          %v868 = vpop.f32.mrb[0].mxu0
          %v869 = vpop.f32.mrb[0].mxu0
          %v870 = vadd.f32 %v694, %v869
          %v871 = vpop.f32.mrb[0].mxu0
          %872 = vmatprep.mubr.bf16.mxu0 0
          %873 = vmatmul.mubr.bf16.gmra.mrb[0].mxu0 %v405
          %v874 = vpop.f32.mrb[0].mxu0
          %v875 = vadd.f32 %v694, %v874
          %v876 = vpop.f32.mrb[0].mxu0
          %v877 = vpop.f32.mrb[0].mxu0
          %v878 = vadd.f32 %v694, %v877
          %v879 = vpop.f32.mrb[0].mxu0
          %880 = vmatprep.mubr.bf16.mxu0 0
          %881 = vmatmul.mubr.bf16.gmra.mrb[0].mxu0 %v406
          %v882 = vpop.f32.mrb[0].mxu0
          %v883 = vadd.f32 %v694, %v882
          %v884 = vpop.f32.mrb[0].mxu0
          %v885 = vpop.f32.mrb[0].mxu0
          %v886 = vadd.f32 %v694, %v885
          %v887 = vpop.f32.mrb[0].mxu0
          %888 = vmatprep.mubr.bf16.mxu0 0
          %889 = vmatmul.mubr.bf16.gmra.mrb[0].mxu0 %v407
          %v890 = vpop.f32.mrb[0].mxu0
          %v891 = vadd.f32 %v694, %v890
          %v892 = vpop.f32.mrb[0].mxu0
          %v893 = vpop.f32.mrb[0].mxu0
          %v894 = vadd.f32 %v694, %v893
          %v895 = vpop.f32.mrb[0].mxu0
          %896 = vmatprep.mubr.bf16.mxu0 0
          %897 = vmatmul.mubr.bf16.gmra.mrb[0].mxu0 %v408
          %v898 = vpop.f32.mrb[0].mxu0
          %v899 = vadd.f32 %v694, %v898
          %v900 = vpop.f32.mrb[0].mxu0
          %v901 = vpop.f32.mrb[0].mxu0
          %v902 = vadd.f32 %v694, %v901
          %v903 = vpop.f32.mrb[0].mxu0
          %904 = vdwg.mxu0
          %v905 = vpack.c.bf16 %v782, %v779
          %v906 = vpack.c.bf16 %v790, %v787
          %v907 = vpack.c.bf16 %v798, %v795
          %v908 = vpack.c.bf16 %v806, %v803
          %v909 = vpack.c.bf16 %v814, %v811
          %v910 = vpack.c.bf16 %v822, %v819
          %v911 = vpack.c.bf16 %v830, %v827
          %v912 = vpack.c.bf16 %v838, %v835
          %v913 = vpack.c.bf16 %v846, %v843
          %v914 = vpack.c.bf16 %v854, %v851
          %v915 = vpack.c.bf16 %v862, %v859
          %v916 = vpack.c.bf16 %v870, %v867
          %v917 = vpack.c.bf16 %v878, %v875
          %v918 = vpack.c.bf16 %v886, %v883
          %v919 = vpack.c.bf16 %v894, %v891
          %v920 = vpack.c.bf16 %v902, %v899
          %921 = vst [vmem:[#allocation3] sm:$0xff] %v905
          %922 = vst [vmem:[#allocation3 + $0x8] sm:$0xff] %v906
          %923 = vst [vmem:[#allocation3 + $0x10] sm:$0xff] %v907
          %924 = vst [vmem:[#allocation3 + $0x18] sm:$0xff] %v908
          %925 = vst [vmem:[#allocation3 + $0x20] sm:$0xff] %v909
          %926 = vst [vmem:[#allocation3 + $0x28] sm:$0xff] %v910
          %927 = vst [vmem:[#allocation3 + $0x30] sm:$0xff] %v911
          %928 = vst [vmem:[#allocation3 + $0x38] sm:$0xff] %v912
          %929 = vst [vmem:[#allocation3 + $0x40] sm:$0xff] %v913
          %930 = vst [vmem:[#allocation3 + $0x48] sm:$0xff] %v914
          %931 = vst [vmem:[#allocation3 + $0x50] sm:$0xff] %v915
          %932 = vst [vmem:[#allocation3 + $0x58] sm:$0xff] %v916
          %933 = vst [vmem:[#allocation3 + $0x60] sm:$0xff] %v917
          %934 = vst [vmem:[#allocation3 + $0x68] sm:$0xff] %v918
          %935 = vst [vmem:[#allocation3 + $0x70] sm:$0xff] %v919
          %936 = vst [vmem:[#allocation3 + $0x78] sm:$0xff] %v920
        $region68: #{tpu_custom_call.1} parent=47 // pred_fallthru
          _
        %s937 = smul.u32 %s31, 256
        %s938 = scalar_lea.vmem %s312, %s937 [#allocation4]
        %v939 = vld [vmem:[%s938] sm:$0xff]
        %v940 = vld [vmem:[%s938 + $0x8] sm:$0xff]
        %v941 = vld [vmem:[%s938 + $0x10] sm:$0xff]
        %v942 = vld [vmem:[%s938 + $0x18] sm:$0xff]
        %v943 = vld [vmem:[%s938 + $0x20] sm:$0xff]
        %v944 = vld [vmem:[%s938 + $0x28] sm:$0xff]
        %v945 = vld [vmem:[%s938 + $0x30] sm:$0xff]
        %v946 = vld [vmem:[%s938 + $0x38] sm:$0xff]
        %v947 = vld [vmem:[%s938 + $0x40] sm:$0xff]
        %v948 = vld [vmem:[%s938 + $0x48] sm:$0xff]
        %v949 = vld [vmem:[%s938 + $0x50] sm:$0xff]
        %v950 = vld [vmem:[%s938 + $0x58] sm:$0xff]
        %v951 = vld [vmem:[%s938 + $0x60] sm:$0xff]
        %v952 = vld [vmem:[%s938 + $0x68] sm:$0xff]
        %v953 = vld [vmem:[%s938 + $0x70] sm:$0xff]
        %v954 = vld [vmem:[%s938 + $0x78] sm:$0xff]
        %v955 = vld [vmem:[%s938 + $0x80] sm:$0xff]
        %v956 = vld [vmem:[%s938 + $0x88] sm:$0xff]
        %v957 = vld [vmem:[%s938 + $0x90] sm:$0xff]
        %v958 = vld [vmem:[%s938 + $0x98] sm:$0xff]
        %v959 = vld [vmem:[%s938 + $0xa0] sm:$0xff]
        %v960 = vld [vmem:[%s938 + $0xa8] sm:$0xff]
        %v961 = vld [vmem:[%s938 + $0xb0] sm:$0xff]
        %v962 = vld [vmem:[%s938 + $0xb8] sm:$0xff]
        %v963 = vld [vmem:[%s938 + $0xc0] sm:$0xff]
        %v964 = vld [vmem:[%s938 + $0xc8] sm:$0xff]
        %v965 = vld [vmem:[%s938 + $0xd0] sm:$0xff]
        %v966 = vld [vmem:[%s938 + $0xd8] sm:$0xff]
        %v967 = vld [vmem:[%s938 + $0xe0] sm:$0xff]
        %v968 = vld [vmem:[%s938 + $0xe8] sm:$0xff]
        %v969 = vld [vmem:[%s938 + $0xf0] sm:$0xff]
        %v970 = vld [vmem:[%s938 + $0xf8] sm:$0xff]
        %v971 = vpack.c.bf16 %v940, %v939
        %v972 = vpack.c.bf16 %v942, %v941
        %v973 = vpack.c.bf16 %v944, %v943
        %v974 = vpack.c.bf16 %v946, %v945
        %v975 = vpack.c.bf16 %v948, %v947
        %v976 = vpack.c.bf16 %v950, %v949
        %v977 = vpack.c.bf16 %v952, %v951
        %v978 = vpack.c.bf16 %v954, %v953
        %v979 = vpack.c.bf16 %v956, %v955
        %v980 = vpack.c.bf16 %v958, %v957
        %v981 = vpack.c.bf16 %v960, %v959
        %v982 = vpack.c.bf16 %v962, %v961
        %v983 = vpack.c.bf16 %v964, %v963
        %v984 = vpack.c.bf16 %v966, %v965
        %v985 = vpack.c.bf16 %v968, %v967
        %v986 = vpack.c.bf16 %v970, %v969
        %v987 = vld [vmem:[#allocation7] sm:$0xf]
        %v988 = vld [vmem:[#allocation7 + $0x4] sm:$0xf]
        %v989 = vld [vmem:[#allocation7 + $0x8] sm:$0xf]
        %v990 = vld [vmem:[#allocation7 + $0xc] sm:$0xf]
        %v991 = vld [vmem:[#allocation7 + $0x10] sm:$0xf]
        %v992 = vld [vmem:[#allocation7 + $0x14] sm:$0xf]
        %v993 = vld [vmem:[#allocation7 + $0x18] sm:$0xf]
        %v994 = vld [vmem:[#allocation7 + $0x1c] sm:$0xf]
        %v995 = vld [vmem:[#allocation7 + $0x20] sm:$0xf]
        %v996 = vld [vmem:[#allocation7 + $0x24] sm:$0xf]
        %v997 = vld [vmem:[#allocation7 + $0x28] sm:$0xf]
        %v998 = vld [vmem:[#allocation7 + $0x2c] sm:$0xf]
        %v999 = vld [vmem:[#allocation7 + $0x30] sm:$0xf]
        %v1000 = vld [vmem:[#allocation7 + $0x34] sm:$0xf]
        %v1001 = vld [vmem:[#allocation7 + $0x38] sm:$0xf]
        %v1002 = vld [vmem:[#allocation7 + $0x3c] sm:$0xf]
        %v1003 = vld [vmem:[%s4] sm:$0x1]
        %v1005 = vlaneseq
        %v1006 = vshrl.u32 %v1005, 7
        %v1007 = vsub.s32 0, %v1006
        %v1008 = vrot.slane %v1003, %v1007
        %v1026 = vunpack.c.l.b16 %v987
        %v1027 = vunpack.c.l.b16 %v988
        %v1028 = vunpack.c.l.b16 %v989
        %v1029 = vunpack.c.l.b16 %v990
        %v1030 = vunpack.c.l.b16 %v991
        %v1031 = vunpack.c.l.b16 %v992
        %v1032 = vunpack.c.l.b16 %v993
        %v1033 = vunpack.c.l.b16 %v994
        %v1034 = vunpack.c.l.b16 %v995
        %v1035 = vunpack.c.l.b16 %v996
        %v1036 = vunpack.c.l.b16 %v997
        %v1037 = vunpack.c.l.b16 %v998
        %v1038 = vunpack.c.l.b16 %v999
        %v1039 = vunpack.c.l.b16 %v1000
        %v1040 = vunpack.c.l.b16 %v1001
        %v1041 = vunpack.c.l.b16 %v1002
        %v1042 = vpack.c.b16 %v1027, %v1026
        %v1043 = vpack.c.b16 %v1029, %v1028
        %v1044 = vpack.c.b16 %v1031, %v1030
        %v1045 = vpack.c.b16 %v1033, %v1032
        %v1046 = vpack.c.b16 %v1035, %v1034
        %v1047 = vpack.c.b16 %v1037, %v1036
        %v1048 = vpack.c.b16 %v1039, %v1038
        %v1049 = vpack.c.b16 %v1041, %v1040
        %1058 = vmatprep.subr.bf16.mxu0 0
        %1059 = vmatpush1.bf16.msra.mxu0 %v1042
        %1060 = vmatprep.subr.bf16.mxu0 0
        %1061 = vmatpush1.bf16.msra.mxu0 %v1043
        %1062 = vmatprep.subr.bf16.mxu0 0
        %1063 = vmatpush1.bf16.msra.mxu0 %v1044
        %1064 = vmatprep.subr.bf16.mxu0 0
        %1065 = vmatpush1.bf16.msra.mxu0 %v1045
        %1066 = vmatprep.subr.bf16.mxu0 0
        %1067 = vmatpush1.bf16.msra.mxu0 %v1046
        %1068 = vmatprep.subr.bf16.mxu0 0
        %1069 = vmatpush1.bf16.msra.mxu0 %v1047
        %1070 = vmatprep.subr.bf16.mxu0 0
        %1071 = vmatpush1.bf16.msra.mxu0 %v1048
        %1072 = vmatprep.subr.bf16.mxu0 0
        %1073 = vmatpush1.bf16.msra.mxu0 %v1049
        %1074 = vmatprep.subr.bf16.mxu0 0
        %1075 = vmatpush1.bf16.msra.mxu0 0
        %1076 = vmatprep.subr.bf16.mxu0 0
        %1077 = vmatpush1.bf16.msra.mxu0 0
        %1078 = vmatprep.subr.bf16.mxu0 0
        %1079 = vmatpush1.bf16.msra.mxu0 0
        %1080 = vmatprep.subr.bf16.mxu0 0
        %1081 = vmatpush1.bf16.msra.mxu0 0
        %1082 = vmatprep.subr.bf16.mxu0 0
        %1083 = vmatpush1.bf16.msra.mxu0 0
        %1084 = vmatprep.subr.bf16.mxu0 0
        %1085 = vmatpush1.bf16.msra.mxu0 0
        %1086 = vmatprep.subr.bf16.mxu0 0
        %1087 = vmatpush1.bf16.msra.mxu0 0
        %1088 = vmatprep.subr.bf16.mxu0 0
        %1089 = vmatpush1.bf16.msra.mxu0 0
        %1090 = vmatprep.mubr.bf16.mxu0 0
        %1091 = vmatmul.mubr.bf16.gmra.mrb[0].mxu0 %v971
        %v1092 = vpop.f32.mrb[0].mxu0
        %v1093 = vadd.f32 %v1008, %v1092
        %v1094 = vpop.f32.mrb[0].mxu0
        %v1095 = vpop.f32.mrb[0].mxu0
        %v1096 = vadd.f32 %v1008, %v1095
        %v1097 = vpop.f32.mrb[0].mxu0
        %1098 = vmatprep.mubr.bf16.mxu0 0
        %1099 = vmatmul.mubr.bf16.gmra.mrb[0].mxu0 %v972
        %v1100 = vpop.f32.mrb[0].mxu0
        %v1101 = vadd.f32 %v1008, %v1100
        %v1102 = vpop.f32.mrb[0].mxu0
        %v1103 = vpop.f32.mrb[0].mxu0
        %v1104 = vadd.f32 %v1008, %v1103
        %v1105 = vpop.f32.mrb[0].mxu0
        %1106 = vmatprep.mubr.bf16.mxu0 0
        %1107 = vmatmul.mubr.bf16.gmra.mrb[0].mxu0 %v973
        %v1108 = vpop.f32.mrb[0].mxu0
        %v1109 = vadd.f32 %v1008, %v1108
        %v1110 = vpop.f32.mrb[0].mxu0
        %v1111 = vpop.f32.mrb[0].mxu0
        %v1112 = vadd.f32 %v1008, %v1111
        %v1113 = vpop.f32.mrb[0].mxu0
        %1114 = vmatprep.mubr.bf16.mxu0 0
        %1115 = vmatmul.mubr.bf16.gmra.mrb[0].mxu0 %v974
        %v1116 = vpop.f32.mrb[0].mxu0
        %v1117 = vadd.f32 %v1008, %v1116
        %v1118 = vpop.f32.mrb[0].mxu0
        %v1119 = vpop.f32.mrb[0].mxu0
        %v1120 = vadd.f32 %v1008, %v1119
        %v1121 = vpop.f32.mrb[0].mxu0
        %1122 = vmatprep.mubr.bf16.mxu0 0
        %1123 = vmatmul.mubr.bf16.gmra.mrb[0].mxu0 %v975
        %v1124 = vpop.f32.mrb[0].mxu0
        %v1125 = vadd.f32 %v1008, %v1124
        %v1126 = vpop.f32.mrb[0].mxu0
        %v1127 = vpop.f32.mrb[0].mxu0
        %v1128 = vadd.f32 %v1008, %v1127
        %v1129 = vpop.f32.mrb[0].mxu0
        %1130 = vmatprep.mubr.bf16.mxu0 0
        %1131 = vmatmul.mubr.bf16.gmra.mrb[0].mxu0 %v976
        %v1132 = vpop.f32.mrb[0].mxu0
        %v1133 = vadd.f32 %v1008, %v1132
        %v1134 = vpop.f32.mrb[0].mxu0
        %v1135 = vpop.f32.mrb[0].mxu0
        %v1136 = vadd.f32 %v1008, %v1135
        %v1137 = vpop.f32.mrb[0].mxu0
        %1138 = vmatprep.mubr.bf16.mxu0 0
        %1139 = vmatmul.mubr.bf16.gmra.mrb[0].mxu0 %v977
        %v1140 = vpop.f32.mrb[0].mxu0
        %v1141 = vadd.f32 %v1008, %v1140
        %v1142 = vpop.f32.mrb[0].mxu0
        %v1143 = vpop.f32.mrb[0].mxu0
        %v1144 = vadd.f32 %v1008, %v1143
        %v1145 = vpop.f32.mrb[0].mxu0
        %1146 = vmatprep.mubr.bf16.mxu0 0
        %1147 = vmatmul.mubr.bf16.gmra.mrb[0].mxu0 %v978
        %v1148 = vpop.f32.mrb[0].mxu0
        %v1149 = vadd.f32 %v1008, %v1148
        %v1150 = vpop.f32.mrb[0].mxu0
        %v1151 = vpop.f32.mrb[0].mxu0
        %v1152 = vadd.f32 %v1008, %v1151
        %v1153 = vpop.f32.mrb[0].mxu0
        %1154 = vmatprep.mubr.bf16.mxu0 0
        %1155 = vmatmul.mubr.bf16.gmra.mrb[0].mxu0 %v979
        %v1156 = vpop.f32.mrb[0].mxu0
        %v1157 = vadd.f32 %v1008, %v1156
        %v1158 = vpop.f32.mrb[0].mxu0
        %v1159 = vpop.f32.mrb[0].mxu0
        %v1160 = vadd.f32 %v1008, %v1159
        %v1161 = vpop.f32.mrb[0].mxu0
        %1162 = vmatprep.mubr.bf16.mxu0 0
        %1163 = vmatmul.mubr.bf16.gmra.mrb[0].mxu0 %v980
        %v1164 = vpop.f32.mrb[0].mxu0
        %v1165 = vadd.f32 %v1008, %v1164
        %v1166 = vpop.f32.mrb[0].mxu0
        %v1167 = vpop.f32.mrb[0].mxu0
        %v1168 = vadd.f32 %v1008, %v1167
        %v1169 = vpop.f32.mrb[0].mxu0
        %1170 = vmatprep.mubr.bf16.mxu0 0
        %1171 = vmatmul.mubr.bf16.gmra.mrb[0].mxu0 %v981
        %v1172 = vpop.f32.mrb[0].mxu0
        %v1173 = vadd.f32 %v1008, %v1172
        %v1174 = vpop.f32.mrb[0].mxu0
        %v1175 = vpop.f32.mrb[0].mxu0
        %v1176 = vadd.f32 %v1008, %v1175
        %v1177 = vpop.f32.mrb[0].mxu0
        %1178 = vmatprep.mubr.bf16.mxu0 0
        %1179 = vmatmul.mubr.bf16.gmra.mrb[0].mxu0 %v982
        %v1180 = vpop.f32.mrb[0].mxu0
        %v1181 = vadd.f32 %v1008, %v1180
        %v1182 = vpop.f32.mrb[0].mxu0
        %v1183 = vpop.f32.mrb[0].mxu0
        %v1184 = vadd.f32 %v1008, %v1183
        %v1185 = vpop.f32.mrb[0].mxu0
        %1186 = vmatprep.mubr.bf16.mxu0 0
        %1187 = vmatmul.mubr.bf16.gmra.mrb[0].mxu0 %v983
        %v1188 = vpop.f32.mrb[0].mxu0
        %v1189 = vadd.f32 %v1008, %v1188
        %v1190 = vpop.f32.mrb[0].mxu0
        %v1191 = vpop.f32.mrb[0].mxu0
        %v1192 = vadd.f32 %v1008, %v1191
        %v1193 = vpop.f32.mrb[0].mxu0
        %1194 = vmatprep.mubr.bf16.mxu0 0
        %1195 = vmatmul.mubr.bf16.gmra.mrb[0].mxu0 %v984
        %v1196 = vpop.f32.mrb[0].mxu0
        %v1197 = vadd.f32 %v1008, %v1196
        %v1198 = vpop.f32.mrb[0].mxu0
        %v1199 = vpop.f32.mrb[0].mxu0
        %v1200 = vadd.f32 %v1008, %v1199
        %v1201 = vpop.f32.mrb[0].mxu0
        %1202 = vmatprep.mubr.bf16.mxu0 0
        %1203 = vmatmul.mubr.bf16.gmra.mrb[0].mxu0 %v985
        %v1204 = vpop.f32.mrb[0].mxu0
        %v1205 = vadd.f32 %v1008, %v1204
        %v1206 = vpop.f32.mrb[0].mxu0
        %v1207 = vpop.f32.mrb[0].mxu0
        %v1208 = vadd.f32 %v1008, %v1207
        %v1209 = vpop.f32.mrb[0].mxu0
        %1210 = vmatprep.mubr.bf16.mxu0 0
        %1211 = vmatmul.mubr.bf16.gmra.mrb[0].mxu0 %v986
        %v1212 = vpop.f32.mrb[0].mxu0
        %v1213 = vadd.f32 %v1008, %v1212
        %v1214 = vpop.f32.mrb[0].mxu0
        %v1215 = vpop.f32.mrb[0].mxu0
        %v1216 = vadd.f32 %v1008, %v1215
        %v1217 = vpop.f32.mrb[0].mxu0
        %1218 = vdwg.mxu0
        %v1219 = vpack.c.bf16 %v1096, %v1093
        %v1220 = vpack.c.bf16 %v1104, %v1101
        %v1221 = vpack.c.bf16 %v1112, %v1109
        %v1222 = vpack.c.bf16 %v1120, %v1117
        %v1223 = vpack.c.bf16 %v1128, %v1125
        %v1224 = vpack.c.bf16 %v1136, %v1133
        %v1225 = vpack.c.bf16 %v1144, %v1141
        %v1226 = vpack.c.bf16 %v1152, %v1149
        %v1227 = vpack.c.bf16 %v1160, %v1157
        %v1228 = vpack.c.bf16 %v1168, %v1165
        %v1229 = vpack.c.bf16 %v1176, %v1173
        %v1230 = vpack.c.bf16 %v1184, %v1181
        %v1231 = vpack.c.bf16 %v1192, %v1189
        %v1232 = vpack.c.bf16 %v1200, %v1197
        %v1233 = vpack.c.bf16 %v1208, %v1205
        %v1234 = vpack.c.bf16 %v1216, %v1213
        %v1235 = vld [vmem:[#allocation2] sm:$0xff]
        %v1236 = vld [vmem:[#allocation2 + $0x8] sm:$0xff]
        %v1237 = vld [vmem:[#allocation2 + $0x10] sm:$0xff]
        %v1238 = vld [vmem:[#allocation2 + $0x18] sm:$0xff]
        %v1239 = vld [vmem:[#allocation2 + $0x20] sm:$0xff]
        %v1240 = vld [vmem:[#allocation2 + $0x28] sm:$0xff]
        %v1241 = vld [vmem:[#allocation2 + $0x30] sm:$0xff]
        %v1242 = vld [vmem:[#allocation2 + $0x38] sm:$0xff]
        %v1243 = vld [vmem:[#allocation2 + $0x40] sm:$0xff]
        %v1244 = vld [vmem:[#allocation2 + $0x48] sm:$0xff]
        %v1245 = vld [vmem:[#allocation2 + $0x50] sm:$0xff]
        %v1246 = vld [vmem:[#allocation2 + $0x58] sm:$0xff]
        %v1247 = vld [vmem:[#allocation2 + $0x60] sm:$0xff]
        %v1248 = vld [vmem:[#allocation2 + $0x68] sm:$0xff]
        %v1249 = vld [vmem:[#allocation2 + $0x70] sm:$0xff]
        %v1250 = vld [vmem:[#allocation2 + $0x78] sm:$0xff]
        %1251 = vmatprep.subr.bf16.mxu0 0
        %1252 = vmatpush1.bf16.xpose.msra.mxu0 %v1235
        %1253 = vmatprep.subr.bf16.mxu0 0
        %1254 = vmatpush1.bf16.xpose.msra.mxu0 %v1236
        %1255 = vmatprep.subr.bf16.mxu0 0
        %1256 = vmatpush1.bf16.xpose.msra.mxu0 %v1237
        %1257 = vmatprep.subr.bf16.mxu0 0
        %1258 = vmatpush1.bf16.xpose.msra.mxu0 %v1238
        %1259 = vmatprep.subr.bf16.mxu0 0
        %1260 = vmatpush1.bf16.xpose.msra.mxu0 %v1239
        %1261 = vmatprep.subr.bf16.mxu0 0
        %1262 = vmatpush1.bf16.xpose.msra.mxu0 %v1240
        %1263 = vmatprep.subr.bf16.mxu0 0
        %1264 = vmatpush1.bf16.xpose.msra.mxu0 %v1241
        %1265 = vmatprep.subr.bf16.mxu0 0
        %1266 = vmatpush1.bf16.xpose.msra.mxu0 %v1242
        %1267 = vmatprep.subr.bf16.mxu0 0
        %1268 = vmatpush1.bf16.xpose.msra.mxu0 %v1243
        %1269 = vmatprep.subr.bf16.mxu0 0
        %1270 = vmatpush1.bf16.xpose.msra.mxu0 %v1244
        %1271 = vmatprep.subr.bf16.mxu0 0
        %1272 = vmatpush1.bf16.xpose.msra.mxu0 %v1245
        %1273 = vmatprep.subr.bf16.mxu0 0
        %1274 = vmatpush1.bf16.xpose.msra.mxu0 %v1246
        %1275 = vmatprep.subr.bf16.mxu0 0
        %1276 = vmatpush1.bf16.xpose.msra.mxu0 %v1247
        %1277 = vmatprep.subr.bf16.mxu0 0
        %1278 = vmatpush1.bf16.xpose.msra.mxu0 %v1248
        %1279 = vmatprep.subr.bf16.mxu0 0
        %1280 = vmatpush1.bf16.xpose.msra.mxu0 %v1249
        %1281 = vmatprep.subr.bf16.mxu0 0
        %1282 = vmatpush1.bf16.xpose.msra.mxu0 %v1250
        %1283 = vmatprep.mubr.bf16.mxu0 0
        %1284 = vmatmul.mubr.bf16.gmra.mrb[0].mxu0 %v1219
        %v1285 = vpop.f32.mrb[0].mxu0
        %v1286 = vadd.f32 0.0, %v1285
        %v1287 = vpop.f32.mrb[0].mxu0
        %v1288 = vadd.f32 0.0, %v1287
        %v1289 = vpop.f32.mrb[0].mxu0
        %v1290 = vadd.f32 0.0, %v1289
        %v1291 = vpop.f32.mrb[0].mxu0
        %v1292 = vadd.f32 0.0, %v1291
        %1293 = vmatprep.mubr.bf16.mxu0 0
        %1294 = vmatmul.mubr.bf16.gmra.mrb[0].mxu0 %v1220
        %v1295 = vpop.f32.mrb[0].mxu0
        %v1296 = vadd.f32 0.0, %v1295
        %v1297 = vpop.f32.mrb[0].mxu0
        %v1298 = vadd.f32 0.0, %v1297
        %v1299 = vpop.f32.mrb[0].mxu0
        %v1300 = vadd.f32 0.0, %v1299
        %v1301 = vpop.f32.mrb[0].mxu0
        %v1302 = vadd.f32 0.0, %v1301
        %1303 = vmatprep.mubr.bf16.mxu0 0
        %1304 = vmatmul.mubr.bf16.gmra.mrb[0].mxu0 %v1221
        %v1305 = vpop.f32.mrb[0].mxu0
        %v1306 = vadd.f32 0.0, %v1305
        %v1307 = vpop.f32.mrb[0].mxu0
        %v1308 = vadd.f32 0.0, %v1307
        %v1309 = vpop.f32.mrb[0].mxu0
        %v1310 = vadd.f32 0.0, %v1309
        %v1311 = vpop.f32.mrb[0].mxu0
        %v1312 = vadd.f32 0.0, %v1311
        %1313 = vmatprep.mubr.bf16.mxu0 0
        %1314 = vmatmul.mubr.bf16.gmra.mrb[0].mxu0 %v1222
        %v1315 = vpop.f32.mrb[0].mxu0
        %v1316 = vadd.f32 0.0, %v1315
        %v1317 = vpop.f32.mrb[0].mxu0
        %v1318 = vadd.f32 0.0, %v1317
        %v1319 = vpop.f32.mrb[0].mxu0
        %v1320 = vadd.f32 0.0, %v1319
        %v1321 = vpop.f32.mrb[0].mxu0
        %v1322 = vadd.f32 0.0, %v1321
        %1323 = vmatprep.mubr.bf16.mxu0 0
        %1324 = vmatmul.mubr.bf16.gmra.mrb[0].mxu0 %v1223
        %v1325 = vpop.f32.mrb[0].mxu0
        %v1326 = vadd.f32 0.0, %v1325
        %v1327 = vpop.f32.mrb[0].mxu0
        %v1328 = vadd.f32 0.0, %v1327
        %v1329 = vpop.f32.mrb[0].mxu0
        %v1330 = vadd.f32 0.0, %v1329
        %v1331 = vpop.f32.mrb[0].mxu0
        %v1332 = vadd.f32 0.0, %v1331
        %1333 = vmatprep.mubr.bf16.mxu0 0
        %1334 = vmatmul.mubr.bf16.gmra.mrb[0].mxu0 %v1224
        %v1335 = vpop.f32.mrb[0].mxu0
        %v1336 = vadd.f32 0.0, %v1335
        %v1337 = vpop.f32.mrb[0].mxu0
        %v1338 = vadd.f32 0.0, %v1337
        %v1339 = vpop.f32.mrb[0].mxu0
        %v1340 = vadd.f32 0.0, %v1339
        %v1341 = vpop.f32.mrb[0].mxu0
        %v1342 = vadd.f32 0.0, %v1341
        %1343 = vmatprep.mubr.bf16.mxu0 0
        %1344 = vmatmul.mubr.bf16.gmra.mrb[0].mxu0 %v1225
        %v1345 = vpop.f32.mrb[0].mxu0
        %v1346 = vadd.f32 0.0, %v1345
        %v1347 = vpop.f32.mrb[0].mxu0
        %v1348 = vadd.f32 0.0, %v1347
        %v1349 = vpop.f32.mrb[0].mxu0
        %v1350 = vadd.f32 0.0, %v1349
        %v1351 = vpop.f32.mrb[0].mxu0
        %v1352 = vadd.f32 0.0, %v1351
        %1353 = vmatprep.mubr.bf16.mxu0 0
        %1354 = vmatmul.mubr.bf16.gmra.mrb[0].mxu0 %v1226
        %v1355 = vpop.f32.mrb[0].mxu0
        %v1356 = vadd.f32 0.0, %v1355
        %v1357 = vpop.f32.mrb[0].mxu0
        %v1358 = vadd.f32 0.0, %v1357
        %v1359 = vpop.f32.mrb[0].mxu0
        %v1360 = vadd.f32 0.0, %v1359
        %v1361 = vpop.f32.mrb[0].mxu0
        %v1362 = vadd.f32 0.0, %v1361
        %1363 = vmatprep.mubr.bf16.mxu0 0
        %1364 = vmatmul.mubr.bf16.gmra.mrb[0].mxu0 %v1227
        %v1365 = vpop.f32.mrb[0].mxu0
        %v1366 = vadd.f32 0.0, %v1365
        %v1367 = vpop.f32.mrb[0].mxu0
        %v1368 = vadd.f32 0.0, %v1367
        %v1369 = vpop.f32.mrb[0].mxu0
        %v1370 = vadd.f32 0.0, %v1369
        %v1371 = vpop.f32.mrb[0].mxu0
        %v1372 = vadd.f32 0.0, %v1371
        %1373 = vmatprep.mubr.bf16.mxu0 0
        %1374 = vmatmul.mubr.bf16.gmra.mrb[0].mxu0 %v1228
        %v1375 = vpop.f32.mrb[0].mxu0
        %v1376 = vadd.f32 0.0, %v1375
        %v1377 = vpop.f32.mrb[0].mxu0
        %v1378 = vadd.f32 0.0, %v1377
        %v1379 = vpop.f32.mrb[0].mxu0
        %v1380 = vadd.f32 0.0, %v1379
        %v1381 = vpop.f32.mrb[0].mxu0
        %v1382 = vadd.f32 0.0, %v1381
        %1383 = vmatprep.mubr.bf16.mxu0 0
        %1384 = vmatmul.mubr.bf16.gmra.mrb[0].mxu0 %v1229
        %v1385 = vpop.f32.mrb[0].mxu0
        %v1386 = vadd.f32 0.0, %v1385
        %v1387 = vpop.f32.mrb[0].mxu0
        %v1388 = vadd.f32 0.0, %v1387
        %v1389 = vpop.f32.mrb[0].mxu0
        %v1390 = vadd.f32 0.0, %v1389
        %v1391 = vpop.f32.mrb[0].mxu0
        %v1392 = vadd.f32 0.0, %v1391
        %1393 = vmatprep.mubr.bf16.mxu0 0
        %1394 = vmatmul.mubr.bf16.gmra.mrb[0].mxu0 %v1230
        %v1395 = vpop.f32.mrb[0].mxu0
        %v1396 = vadd.f32 0.0, %v1395
        %v1397 = vpop.f32.mrb[0].mxu0
        %v1398 = vadd.f32 0.0, %v1397
        %v1399 = vpop.f32.mrb[0].mxu0
        %v1400 = vadd.f32 0.0, %v1399
        %v1401 = vpop.f32.mrb[0].mxu0
        %v1402 = vadd.f32 0.0, %v1401
        %1403 = vmatprep.mubr.bf16.mxu0 0
        %1404 = vmatmul.mubr.bf16.gmra.mrb[0].mxu0 %v1231
        %v1405 = vpop.f32.mrb[0].mxu0
        %v1406 = vadd.f32 0.0, %v1405
        %v1407 = vpop.f32.mrb[0].mxu0
        %v1408 = vadd.f32 0.0, %v1407
        %v1409 = vpop.f32.mrb[0].mxu0
        %v1410 = vadd.f32 0.0, %v1409
        %v1411 = vpop.f32.mrb[0].mxu0
        %v1412 = vadd.f32 0.0, %v1411
        %1413 = vmatprep.mubr.bf16.mxu0 0
        %1414 = vmatmul.mubr.bf16.gmra.mrb[0].mxu0 %v1232
        %v1415 = vpop.f32.mrb[0].mxu0
        %v1416 = vadd.f32 0.0, %v1415
        %v1417 = vpop.f32.mrb[0].mxu0
        %v1418 = vadd.f32 0.0, %v1417
        %v1419 = vpop.f32.mrb[0].mxu0
        %v1420 = vadd.f32 0.0, %v1419
        %v1421 = vpop.f32.mrb[0].mxu0
        %v1422 = vadd.f32 0.0, %v1421
        %1423 = vmatprep.mubr.bf16.mxu0 0
        %1424 = vmatmul.mubr.bf16.gmra.mrb[0].mxu0 %v1233
        %v1425 = vpop.f32.mrb[0].mxu0
        %v1426 = vadd.f32 0.0, %v1425
        %v1427 = vpop.f32.mrb[0].mxu0
        %v1428 = vadd.f32 0.0, %v1427
        %v1429 = vpop.f32.mrb[0].mxu0
        %v1430 = vadd.f32 0.0, %v1429
        %v1431 = vpop.f32.mrb[0].mxu0
        %v1432 = vadd.f32 0.0, %v1431
        %1433 = vmatprep.mubr.bf16.mxu0 0
        %1434 = vmatmul.mubr.bf16.gmra.mrb[0].mxu0 %v1234
        %v1435 = vpop.f32.mrb[0].mxu0
        %v1436 = vadd.f32 0.0, %v1435
        %v1437 = vpop.f32.mrb[0].mxu0
        %v1438 = vadd.f32 0.0, %v1437
        %v1439 = vpop.f32.mrb[0].mxu0
        %v1440 = vadd.f32 0.0, %v1439
        %v1441 = vpop.f32.mrb[0].mxu0
        %v1442 = vadd.f32 0.0, %v1441
        %1443 = vdwg.mxu0
        %v1444 = vmax.f32 %v1286, %v1288
        %1445 = vmax.xlane.f32.xlu0 %v1444
        %v1446 = vpop.xlane.xlu0 %1445
        %v1447 = vmax.f32 %v1290, %v1292
        %1448 = vmax.xlane.f32.xlu0 %v1447
        %v1449 = vpop.xlane.xlu0 %1448
        %v1450 = vmax.f32 %v1296, %v1298
        %1451 = vmax.xlane.f32.xlu0 %v1450
        %v1452 = vpop.xlane.xlu0 %1451
        %v1453 = vmax.f32 %v1300, %v1302
        %1454 = vmax.xlane.f32.xlu0 %v1453
        %v1455 = vpop.xlane.xlu0 %1454
        %v1456 = vmax.f32 %v1306, %v1308
        %1457 = vmax.xlane.f32.xlu0 %v1456
        %v1458 = vpop.xlane.xlu0 %1457
        %v1459 = vmax.f32 %v1310, %v1312
        %1460 = vmax.xlane.f32.xlu0 %v1459
        %v1461 = vpop.xlane.xlu0 %1460
        %v1462 = vmax.f32 %v1316, %v1318
        %1463 = vmax.xlane.f32.xlu0 %v1462
        %v1464 = vpop.xlane.xlu0 %1463
        %v1465 = vmax.f32 %v1320, %v1322
        %1466 = vmax.xlane.f32.xlu0 %v1465
        %v1467 = vpop.xlane.xlu0 %1466
        %v1468 = vmax.f32 %v1326, %v1328
        %1469 = vmax.xlane.f32.xlu0 %v1468
        %v1470 = vpop.xlane.xlu0 %1469
        %v1471 = vmax.f32 %v1330, %v1332
        %1472 = vmax.xlane.f32.xlu0 %v1471
        %v1473 = vpop.xlane.xlu0 %1472
        %v1474 = vmax.f32 %v1336, %v1338
        %1475 = vmax.xlane.f32.xlu0 %v1474
        %v1476 = vpop.xlane.xlu0 %1475
        %v1477 = vmax.f32 %v1340, %v1342
        %1478 = vmax.xlane.f32.xlu0 %v1477
        %v1479 = vpop.xlane.xlu0 %1478
        %v1480 = vmax.f32 %v1346, %v1348
        %1481 = vmax.xlane.f32.xlu0 %v1480
        %v1482 = vpop.xlane.xlu0 %1481
        %v1483 = vmax.f32 %v1350, %v1352
        %1484 = vmax.xlane.f32.xlu0 %v1483
        %v1485 = vpop.xlane.xlu0 %1484
        %v1486 = vmax.f32 %v1356, %v1358
        %1487 = vmax.xlane.f32.xlu0 %v1486
        %v1488 = vpop.xlane.xlu0 %1487
        %v1489 = vmax.f32 %v1360, %v1362
        %1490 = vmax.xlane.f32.xlu0 %v1489
        %v1491 = vpop.xlane.xlu0 %1490
        %v1492 = vmax.f32 %v1366, %v1368
        %1493 = vmax.xlane.f32.xlu0 %v1492
        %v1494 = vpop.xlane.xlu0 %1493
        %v1495 = vmax.f32 %v1370, %v1372
        %1496 = vmax.xlane.f32.xlu0 %v1495
        %v1497 = vpop.xlane.xlu0 %1496
        %v1498 = vmax.f32 %v1376, %v1378
        %1499 = vmax.xlane.f32.xlu0 %v1498
        %v1500 = vpop.xlane.xlu0 %1499
        %v1501 = vmax.f32 %v1380, %v1382
        %1502 = vmax.xlane.f32.xlu0 %v1501
        %v1503 = vpop.xlane.xlu0 %1502
        %v1504 = vmax.f32 %v1386, %v1388
        %1505 = vmax.xlane.f32.xlu0 %v1504
        %v1506 = vpop.xlane.xlu0 %1505
        %v1507 = vmax.f32 %v1390, %v1392
        %1508 = vmax.xlane.f32.xlu0 %v1507
        %v1509 = vpop.xlane.xlu0 %1508
        %v1510 = vmax.f32 %v1396, %v1398
        %1511 = vmax.xlane.f32.xlu0 %v1510
        %v1512 = vpop.xlane.xlu0 %1511
        %v1513 = vmax.f32 %v1400, %v1402
        %1514 = vmax.xlane.f32.xlu0 %v1513
        %v1515 = vpop.xlane.xlu0 %1514
        %v1516 = vmax.f32 %v1406, %v1408
        %1517 = vmax.xlane.f32.xlu0 %v1516
        %v1518 = vpop.xlane.xlu0 %1517
        %v1519 = vmax.f32 %v1410, %v1412
        %1520 = vmax.xlane.f32.xlu0 %v1519
        %v1521 = vpop.xlane.xlu0 %1520
        %v1522 = vmax.f32 %v1416, %v1418
        %1523 = vmax.xlane.f32.xlu0 %v1522
        %v1524 = vpop.xlane.xlu0 %1523
        %v1525 = vmax.f32 %v1420, %v1422
        %1526 = vmax.xlane.f32.xlu0 %v1525
        %v1527 = vpop.xlane.xlu0 %1526
        %v1528 = vmax.f32 %v1426, %v1428
        %1529 = vmax.xlane.f32.xlu0 %v1528
        %v1530 = vpop.xlane.xlu0 %1529
        %v1531 = vmax.f32 %v1430, %v1432
        %1532 = vmax.xlane.f32.xlu0 %v1531
        %v1533 = vpop.xlane.xlu0 %1532
        %v1534 = vmax.f32 %v1436, %v1438
        %1535 = vmax.xlane.f32.xlu0 %v1534
        %v1536 = vpop.xlane.xlu0 %1535
        %v1537 = vmax.f32 %v1440, %v1442
        %1538 = vmax.xlane.f32.xlu0 %v1537
        %v1539 = vpop.xlane.xlu0 %1538
        %v1540 = vsub.f32 %v1286, %v1446
        %v1541 = vsub.f32 %v1288, %v1446
        %v1542 = vsub.f32 %v1290, %v1449
        %v1543 = vsub.f32 %v1292, %v1449
        %v1544 = vsub.f32 %v1296, %v1452
        %v1545 = vsub.f32 %v1298, %v1452
        %v1546 = vsub.f32 %v1300, %v1455
        %v1547 = vsub.f32 %v1302, %v1455
        %v1548 = vsub.f32 %v1306, %v1458
        %v1549 = vsub.f32 %v1308, %v1458
        %v1550 = vsub.f32 %v1310, %v1461
        %v1551 = vsub.f32 %v1312, %v1461
        %v1552 = vsub.f32 %v1316, %v1464
        %v1553 = vsub.f32 %v1318, %v1464
        %v1554 = vsub.f32 %v1320, %v1467
        %v1555 = vsub.f32 %v1322, %v1467
        %v1556 = vsub.f32 %v1326, %v1470
        %v1557 = vsub.f32 %v1328, %v1470
        %v1558 = vsub.f32 %v1330, %v1473
        %v1559 = vsub.f32 %v1332, %v1473
        %v1560 = vsub.f32 %v1336, %v1476
        %v1561 = vsub.f32 %v1338, %v1476
        %v1562 = vsub.f32 %v1340, %v1479
        %v1563 = vsub.f32 %v1342, %v1479
        %v1564 = vsub.f32 %v1346, %v1482
        %v1565 = vsub.f32 %v1348, %v1482
        %v1566 = vsub.f32 %v1350, %v1485
        %v1567 = vsub.f32 %v1352, %v1485
        %v1568 = vsub.f32 %v1356, %v1488
        %v1569 = vsub.f32 %v1358, %v1488
        %v1570 = vsub.f32 %v1360, %v1491
        %v1571 = vsub.f32 %v1362, %v1491
        %v1572 = vsub.f32 %v1366, %v1494
        %v1573 = vsub.f32 %v1368, %v1494
        %v1574 = vsub.f32 %v1370, %v1497
        %v1575 = vsub.f32 %v1372, %v1497
        %v1576 = vsub.f32 %v1376, %v1500
        %v1577 = vsub.f32 %v1378, %v1500
        %v1578 = vsub.f32 %v1380, %v1503
        %v1579 = vsub.f32 %v1382, %v1503
        %v1580 = vsub.f32 %v1386, %v1506
        %v1581 = vsub.f32 %v1388, %v1506
        %v1582 = vsub.f32 %v1390, %v1509
        %v1583 = vsub.f32 %v1392, %v1509
        %v1584 = vsub.f32 %v1396, %v1512
        %v1585 = vsub.f32 %v1398, %v1512
        %v1586 = vsub.f32 %v1400, %v1515
        %v1587 = vsub.f32 %v1402, %v1515
        %v1588 = vsub.f32 %v1406, %v1518
        %v1589 = vsub.f32 %v1408, %v1518
        %v1590 = vsub.f32 %v1410, %v1521
        %v1591 = vsub.f32 %v1412, %v1521
        %v1592 = vsub.f32 %v1416, %v1524
        %v1593 = vsub.f32 %v1418, %v1524
        %v1594 = vsub.f32 %v1420, %v1527
        %v1595 = vsub.f32 %v1422, %v1527
        %v1596 = vsub.f32 %v1426, %v1530
        %v1597 = vsub.f32 %v1428, %v1530
        %v1598 = vsub.f32 %v1430, %v1533
        %v1599 = vsub.f32 %v1432, %v1533
        %v1600 = vsub.f32 %v1436, %v1536
        %v1601 = vsub.f32 %v1438, %v1536
        %v1602 = vsub.f32 %v1440, %v1539
        %v1603 = vsub.f32 %v1442, %v1539
        %v1604 = vpack.c.bf16 %v1542, %v1540
        %v1605 = vpack.c.bf16 %v1543, %v1541
        %v1606 = vpack.c.bf16 %v1546, %v1544
        %v1607 = vpack.c.bf16 %v1547, %v1545
        %v1608 = vpack.c.bf16 %v1550, %v1548
        %v1609 = vpack.c.bf16 %v1551, %v1549
        %v1610 = vpack.c.bf16 %v1554, %v1552
        %v1611 = vpack.c.bf16 %v1555, %v1553
        %v1612 = vpack.c.bf16 %v1558, %v1556
        %v1613 = vpack.c.bf16 %v1559, %v1557
        %v1614 = vpack.c.bf16 %v1562, %v1560
        %v1615 = vpack.c.bf16 %v1563, %v1561
        %v1616 = vpack.c.bf16 %v1566, %v1564
        %v1617 = vpack.c.bf16 %v1567, %v1565
        %v1618 = vpack.c.bf16 %v1570, %v1568
        %v1619 = vpack.c.bf16 %v1571, %v1569
        %v1620 = vpack.c.bf16 %v1574, %v1572
        %v1621 = vpack.c.bf16 %v1575, %v1573
        %v1622 = vpack.c.bf16 %v1578, %v1576
        %v1623 = vpack.c.bf16 %v1579, %v1577
        %v1624 = vpack.c.bf16 %v1582, %v1580
        %v1625 = vpack.c.bf16 %v1583, %v1581
        %v1626 = vpack.c.bf16 %v1586, %v1584
        %v1627 = vpack.c.bf16 %v1587, %v1585
        %v1628 = vpack.c.bf16 %v1590, %v1588
        %v1629 = vpack.c.bf16 %v1591, %v1589
        %v1630 = vpack.c.bf16 %v1594, %v1592
        %v1631 = vpack.c.bf16 %v1595, %v1593
        %v1632 = vpack.c.bf16 %v1598, %v1596
        %v1633 = vpack.c.bf16 %v1599, %v1597
        %v1634 = vpack.c.bf16 %v1602, %v1600
        %v1635 = vpack.c.bf16 %v1603, %v1601
        %v1637 = vmul.bf16 %v1604, 1069105081
        %v1638 = vpow.bf16.pop %v1637
        %v1640 = vmul.bf16 %v1605, 1069105081
        %v1641 = vpow.bf16.pop %v1640
        %v1643 = vmul.bf16 %v1606, 1069105081
        %v1644 = vpow.bf16.pop %v1643
        %v1646 = vmul.bf16 %v1607, 1069105081
        %v1647 = vpow.bf16.pop %v1646
        %v1649 = vmul.bf16 %v1608, 1069105081
        %v1650 = vpow.bf16.pop %v1649
        %v1652 = vmul.bf16 %v1609, 1069105081
        %v1653 = vpow.bf16.pop %v1652
        %v1655 = vmul.bf16 %v1610, 1069105081
        %v1656 = vpow.bf16.pop %v1655
        %v1658 = vmul.bf16 %v1611, 1069105081
        %v1659 = vpow.bf16.pop %v1658
        %v1661 = vmul.bf16 %v1612, 1069105081
        %v1662 = vpow.bf16.pop %v1661
        %v1664 = vmul.bf16 %v1613, 1069105081
        %v1665 = vpow.bf16.pop %v1664
        %v1667 = vmul.bf16 %v1614, 1069105081
        %v1668 = vpow.bf16.pop %v1667
        %v1670 = vmul.bf16 %v1615, 1069105081
        %v1671 = vpow.bf16.pop %v1670
        %v1673 = vmul.bf16 %v1616, 1069105081
        %v1674 = vpow.bf16.pop %v1673
        %v1676 = vmul.bf16 %v1617, 1069105081
        %v1677 = vpow.bf16.pop %v1676
        %v1679 = vmul.bf16 %v1618, 1069105081
        %v1680 = vpow.bf16.pop %v1679
        %v1682 = vmul.bf16 %v1619, 1069105081
        %v1683 = vpow.bf16.pop %v1682
        %v1685 = vmul.bf16 %v1620, 1069105081
        %v1686 = vpow.bf16.pop %v1685
        %v1688 = vmul.bf16 %v1621, 1069105081
        %v1689 = vpow.bf16.pop %v1688
        %v1691 = vmul.bf16 %v1622, 1069105081
        %v1692 = vpow.bf16.pop %v1691
        %v1694 = vmul.bf16 %v1623, 1069105081
        %v1695 = vpow.bf16.pop %v1694
        %v1697 = vmul.bf16 %v1624, 1069105081
        %v1698 = vpow.bf16.pop %v1697
        %v1700 = vmul.bf16 %v1625, 1069105081
        %v1701 = vpow.bf16.pop %v1700
        %v1703 = vmul.bf16 %v1626, 1069105081
        %v1704 = vpow.bf16.pop %v1703
        %v1706 = vmul.bf16 %v1627, 1069105081
        %v1707 = vpow.bf16.pop %v1706
        %v1709 = vmul.bf16 %v1628, 1069105081
        %v1710 = vpow.bf16.pop %v1709
        %v1712 = vmul.bf16 %v1629, 1069105081
        %v1713 = vpow.bf16.pop %v1712
        %v1715 = vmul.bf16 %v1630, 1069105081
        %v1716 = vpow.bf16.pop %v1715
        %v1718 = vmul.bf16 %v1631, 1069105081
        %v1719 = vpow.bf16.pop %v1718
        %v1721 = vmul.bf16 %v1632, 1069105081
        %v1722 = vpow.bf16.pop %v1721
        %v1724 = vmul.bf16 %v1633, 1069105081
        %v1725 = vpow.bf16.pop %v1724
        %v1727 = vmul.bf16 %v1634, 1069105081
        %v1728 = vpow.bf16.pop %v1727
        %v1730 = vmul.bf16 %v1635, 1069105081
        %v1731 = vpow.bf16.pop %v1730
        %v1732 = vunpack.c.l.bf16 %v1638
        %v1733 = vunpack.c.l.bf16 %v1641
        %v1734 = vunpack.c.h.bf16 %v1638
        %v1735 = vunpack.c.h.bf16 %v1641
        %v1736 = vunpack.c.l.bf16 %v1644
        %v1737 = vunpack.c.l.bf16 %v1647
        %v1738 = vunpack.c.h.bf16 %v1644
        %v1739 = vunpack.c.h.bf16 %v1647
        %v1740 = vunpack.c.l.bf16 %v1650
        %v1741 = vunpack.c.l.bf16 %v1653
        %v1742 = vunpack.c.h.bf16 %v1650
        %v1743 = vunpack.c.h.bf16 %v1653
        %v1744 = vunpack.c.l.bf16 %v1656
        %v1745 = vunpack.c.l.bf16 %v1659
        %v1746 = vunpack.c.h.bf16 %v1656
        %v1747 = vunpack.c.h.bf16 %v1659
        %v1748 = vunpack.c.l.bf16 %v1662
        %v1749 = vunpack.c.l.bf16 %v1665
        %v1750 = vunpack.c.h.bf16 %v1662
        %v1751 = vunpack.c.h.bf16 %v1665
        %v1752 = vunpack.c.l.bf16 %v1668
        %v1753 = vunpack.c.l.bf16 %v1671
        %v1754 = vunpack.c.h.bf16 %v1668
        %v1755 = vunpack.c.h.bf16 %v1671
        %v1756 = vunpack.c.l.bf16 %v1674
        %v1757 = vunpack.c.l.bf16 %v1677
        %v1758 = vunpack.c.h.bf16 %v1674
        %v1759 = vunpack.c.h.bf16 %v1677
        %v1760 = vunpack.c.l.bf16 %v1680
        %v1761 = vunpack.c.l.bf16 %v1683
        %v1762 = vunpack.c.h.bf16 %v1680
        %v1763 = vunpack.c.h.bf16 %v1683
        %v1764 = vunpack.c.l.bf16 %v1686
        %v1765 = vunpack.c.l.bf16 %v1689
        %v1766 = vunpack.c.h.bf16 %v1686
        %v1767 = vunpack.c.h.bf16 %v1689
        %v1768 = vunpack.c.l.bf16 %v1692
        %v1769 = vunpack.c.l.bf16 %v1695
        %v1770 = vunpack.c.h.bf16 %v1692
        %v1771 = vunpack.c.h.bf16 %v1695
        %v1772 = vunpack.c.l.bf16 %v1698
        %v1773 = vunpack.c.l.bf16 %v1701
        %v1774 = vunpack.c.h.bf16 %v1698
        %v1775 = vunpack.c.h.bf16 %v1701
        %v1776 = vunpack.c.l.bf16 %v1704
        %v1777 = vunpack.c.l.bf16 %v1707
        %v1778 = vunpack.c.h.bf16 %v1704
        %v1779 = vunpack.c.h.bf16 %v1707
        %v1780 = vunpack.c.l.bf16 %v1710
        %v1781 = vunpack.c.l.bf16 %v1713
        %v1782 = vunpack.c.h.bf16 %v1710
        %v1783 = vunpack.c.h.bf16 %v1713
        %v1784 = vunpack.c.l.bf16 %v1716
        %v1785 = vunpack.c.l.bf16 %v1719
        %v1786 = vunpack.c.h.bf16 %v1716
        %v1787 = vunpack.c.h.bf16 %v1719
        %v1788 = vunpack.c.l.bf16 %v1722
        %v1789 = vunpack.c.l.bf16 %v1725
        %v1790 = vunpack.c.h.bf16 %v1722
        %v1791 = vunpack.c.h.bf16 %v1725
        %v1792 = vunpack.c.l.bf16 %v1728
        %v1793 = vunpack.c.l.bf16 %v1731
        %v1794 = vunpack.c.h.bf16 %v1728
        %v1795 = vunpack.c.h.bf16 %v1731
        %v1796 = vadd.f32 %v1732, %v1733
        %1797 = vadd.xlane.f32.xlu0 %v1796
        %v1798 = vpop.xlane.xlu0 %1797
        %v1799 = vadd.f32 %v1734, %v1735
        %1800 = vadd.xlane.f32.xlu0 %v1799
        %v1801 = vpop.xlane.xlu0 %1800
        %v1802 = vadd.f32 %v1736, %v1737
        %1803 = vadd.xlane.f32.xlu0 %v1802
        %v1804 = vpop.xlane.xlu0 %1803
        %v1805 = vadd.f32 %v1738, %v1739
        %1806 = vadd.xlane.f32.xlu0 %v1805
        %v1807 = vpop.xlane.xlu0 %1806
        %v1808 = vadd.f32 %v1740, %v1741
        %1809 = vadd.xlane.f32.xlu0 %v1808
        %v1810 = vpop.xlane.xlu0 %1809
        %v1811 = vadd.f32 %v1742, %v1743
        %1812 = vadd.xlane.f32.xlu0 %v1811
        %v1813 = vpop.xlane.xlu0 %1812
        %v1814 = vadd.f32 %v1744, %v1745
        %1815 = vadd.xlane.f32.xlu0 %v1814
        %v1816 = vpop.xlane.xlu0 %1815
        %v1817 = vadd.f32 %v1746, %v1747
        %1818 = vadd.xlane.f32.xlu0 %v1817
        %v1819 = vpop.xlane.xlu0 %1818
        %v1820 = vadd.f32 %v1748, %v1749
        %1821 = vadd.xlane.f32.xlu0 %v1820
        %v1822 = vpop.xlane.xlu0 %1821
        %v1823 = vadd.f32 %v1750, %v1751
        %1824 = vadd.xlane.f32.xlu0 %v1823
        %v1825 = vpop.xlane.xlu0 %1824
        %v1826 = vadd.f32 %v1752, %v1753
        %1827 = vadd.xlane.f32.xlu0 %v1826
        %v1828 = vpop.xlane.xlu0 %1827
        %v1829 = vadd.f32 %v1754, %v1755
        %1830 = vadd.xlane.f32.xlu0 %v1829
        %v1831 = vpop.xlane.xlu0 %1830
        %v1832 = vadd.f32 %v1756, %v1757
        %1833 = vadd.xlane.f32.xlu0 %v1832
        %v1834 = vpop.xlane.xlu0 %1833
        %v1835 = vadd.f32 %v1758, %v1759
        %1836 = vadd.xlane.f32.xlu0 %v1835
        %v1837 = vpop.xlane.xlu0 %1836
        %v1838 = vadd.f32 %v1760, %v1761
        %1839 = vadd.xlane.f32.xlu0 %v1838
        %v1840 = vpop.xlane.xlu0 %1839
        %v1841 = vadd.f32 %v1762, %v1763
        %1842 = vadd.xlane.f32.xlu0 %v1841
        %v1843 = vpop.xlane.xlu0 %1842
        %v1844 = vadd.f32 %v1764, %v1765
        %1845 = vadd.xlane.f32.xlu0 %v1844
        %v1846 = vpop.xlane.xlu0 %1845
        %v1847 = vadd.f32 %v1766, %v1767
        %1848 = vadd.xlane.f32.xlu0 %v1847
        %v1849 = vpop.xlane.xlu0 %1848
        %v1850 = vadd.f32 %v1768, %v1769
        %1851 = vadd.xlane.f32.xlu0 %v1850
        %v1852 = vpop.xlane.xlu0 %1851
        %v1853 = vadd.f32 %v1770, %v1771
        %1854 = vadd.xlane.f32.xlu0 %v1853
        %v1855 = vpop.xlane.xlu0 %1854
        %v1856 = vadd.f32 %v1772, %v1773
        %1857 = vadd.xlane.f32.xlu0 %v1856
        %v1858 = vpop.xlane.xlu0 %1857
        %v1859 = vadd.f32 %v1774, %v1775
        %1860 = vadd.xlane.f32.xlu0 %v1859
        %v1861 = vpop.xlane.xlu0 %1860
        %v1862 = vadd.f32 %v1776, %v1777
        %1863 = vadd.xlane.f32.xlu0 %v1862
        %v1864 = vpop.xlane.xlu0 %1863
        %v1865 = vadd.f32 %v1778, %v1779
        %1866 = vadd.xlane.f32.xlu0 %v1865
        %v1867 = vpop.xlane.xlu0 %1866
        %v1868 = vadd.f32 %v1780, %v1781
        %1869 = vadd.xlane.f32.xlu0 %v1868
        %v1870 = vpop.xlane.xlu0 %1869
        %v1871 = vadd.f32 %v1782, %v1783
        %1872 = vadd.xlane.f32.xlu0 %v1871
        %v1873 = vpop.xlane.xlu0 %1872
        %v1874 = vadd.f32 %v1784, %v1785
        %1875 = vadd.xlane.f32.xlu0 %v1874
        %v1876 = vpop.xlane.xlu0 %1875
        %v1877 = vadd.f32 %v1786, %v1787
        %1878 = vadd.xlane.f32.xlu0 %v1877
        %v1879 = vpop.xlane.xlu0 %1878
        %v1880 = vadd.f32 %v1788, %v1789
        %1881 = vadd.xlane.f32.xlu0 %v1880
        %v1882 = vpop.xlane.xlu0 %1881
        %v1883 = vadd.f32 %v1790, %v1791
        %1884 = vadd.xlane.f32.xlu0 %v1883
        %v1885 = vpop.xlane.xlu0 %1884
        %v1886 = vadd.f32 %v1792, %v1793
        %1887 = vadd.xlane.f32.xlu0 %v1886
        %v1888 = vpop.xlane.xlu0 %1887
        %v1889 = vadd.f32 %v1794, %v1795
        %1890 = vadd.xlane.f32.xlu0 %v1889
        %v1891 = vpop.xlane.xlu0 %1890
        %v1892 = vld [vmem:[#allocation3] sm:$0xff]
        %v1893 = vld [vmem:[#allocation3 + $0x8] sm:$0xff]
        %v1894 = vld [vmem:[#allocation3 + $0x10] sm:$0xff]
        %v1895 = vld [vmem:[#allocation3 + $0x18] sm:$0xff]
        %v1896 = vld [vmem:[#allocation3 + $0x20] sm:$0xff]
        %v1897 = vld [vmem:[#allocation3 + $0x28] sm:$0xff]
        %v1898 = vld [vmem:[#allocation3 + $0x30] sm:$0xff]
        %v1899 = vld [vmem:[#allocation3 + $0x38] sm:$0xff]
        %v1900 = vld [vmem:[#allocation3 + $0x40] sm:$0xff]
        %v1901 = vld [vmem:[#allocation3 + $0x48] sm:$0xff]
        %v1902 = vld [vmem:[#allocation3 + $0x50] sm:$0xff]
        %v1903 = vld [vmem:[#allocation3 + $0x58] sm:$0xff]
        %v1904 = vld [vmem:[#allocation3 + $0x60] sm:$0xff]
        %v1905 = vld [vmem:[#allocation3 + $0x68] sm:$0xff]
        %v1906 = vld [vmem:[#allocation3 + $0x70] sm:$0xff]
        %v1907 = vld [vmem:[#allocation3 + $0x78] sm:$0xff]
        %1908 = vmatprep.subr.bf16.mxu0 0
        %1909 = vmatpush1.bf16.msra.mxu0 %v1892
        %1910 = vmatprep.subr.bf16.mxu0 0
        %1911 = vmatpush1.bf16.msra.mxu0 %v1893
        %1912 = vmatprep.subr.bf16.mxu0 0
        %1913 = vmatpush1.bf16.msra.mxu0 %v1894
        %1914 = vmatprep.subr.bf16.mxu0 0
        %1915 = vmatpush1.bf16.msra.mxu0 %v1895
        %1916 = vmatprep.subr.bf16.mxu0 0
        %1917 = vmatpush1.bf16.msra.mxu0 %v1896
        %1918 = vmatprep.subr.bf16.mxu0 0
        %1919 = vmatpush1.bf16.msra.mxu0 %v1897
        %1920 = vmatprep.subr.bf16.mxu0 0
        %1921 = vmatpush1.bf16.msra.mxu0 %v1898
        %1922 = vmatprep.subr.bf16.mxu0 0
        %1923 = vmatpush1.bf16.msra.mxu0 %v1899
        %1924 = vmatprep.subr.bf16.mxu0 0
        %1925 = vmatpush1.bf16.msra.mxu0 %v1900
        %1926 = vmatprep.subr.bf16.mxu0 0
        %1927 = vmatpush1.bf16.msra.mxu0 %v1901
        %1928 = vmatprep.subr.bf16.mxu0 0
        %1929 = vmatpush1.bf16.msra.mxu0 %v1902
        %1930 = vmatprep.subr.bf16.mxu0 0
        %1931 = vmatpush1.bf16.msra.mxu0 %v1903
        %1932 = vmatprep.subr.bf16.mxu0 0
        %1933 = vmatpush1.bf16.msra.mxu0 %v1904
        %1934 = vmatprep.subr.bf16.mxu0 0
        %1935 = vmatpush1.bf16.msra.mxu0 %v1905
        %1936 = vmatprep.subr.bf16.mxu0 0
        %1937 = vmatpush1.bf16.msra.mxu0 %v1906
        %1938 = vmatprep.subr.bf16.mxu0 0
        %1939 = vmatpush1.bf16.msra.mxu0 %v1907
        %1940 = vmatprep.mubr.bf16.mxu0 %v1641
        %1941 = vmatmul.mubr.bf16.gmra.mrb[0].mxu0 %v1638
        %v1942 = vpop.f32.mrb[0].mxu0
        %v1943 = vadd.f32 0.0, %v1942
        %v1944 = vpop.f32.mrb[0].mxu0
        %v1945 = vpop.f32.mrb[0].mxu0
        %v1946 = vadd.f32 0.0, %v1945
        %v1947 = vpop.f32.mrb[0].mxu0
        %1948 = vmatprep.mubr.bf16.mxu0 %v1647
        %1949 = vmatmul.mubr.bf16.gmra.mrb[0].mxu0 %v1644
        %v1950 = vpop.f32.mrb[0].mxu0
        %v1951 = vadd.f32 0.0, %v1950
        %v1952 = vpop.f32.mrb[0].mxu0
        %v1953 = vpop.f32.mrb[0].mxu0
        %v1954 = vadd.f32 0.0, %v1953
        %v1955 = vpop.f32.mrb[0].mxu0
        %1956 = vmatprep.mubr.bf16.mxu0 %v1653
        %1957 = vmatmul.mubr.bf16.gmra.mrb[0].mxu0 %v1650
        %v1958 = vpop.f32.mrb[0].mxu0
        %v1959 = vadd.f32 0.0, %v1958
        %v1960 = vpop.f32.mrb[0].mxu0
        %v1961 = vpop.f32.mrb[0].mxu0
        %v1962 = vadd.f32 0.0, %v1961
        %v1963 = vpop.f32.mrb[0].mxu0
        %1964 = vmatprep.mubr.bf16.mxu0 %v1659
        %1965 = vmatmul.mubr.bf16.gmra.mrb[0].mxu0 %v1656
        %v1966 = vpop.f32.mrb[0].mxu0
        %v1967 = vadd.f32 0.0, %v1966
        %v1968 = vpop.f32.mrb[0].mxu0
        %v1969 = vpop.f32.mrb[0].mxu0
        %v1970 = vadd.f32 0.0, %v1969
        %v1971 = vpop.f32.mrb[0].mxu0
        %1972 = vmatprep.mubr.bf16.mxu0 %v1665
        %1973 = vmatmul.mubr.bf16.gmra.mrb[0].mxu0 %v1662
        %v1974 = vpop.f32.mrb[0].mxu0
        %v1975 = vadd.f32 0.0, %v1974
        %v1976 = vpop.f32.mrb[0].mxu0
        %v1977 = vpop.f32.mrb[0].mxu0
        %v1978 = vadd.f32 0.0, %v1977
        %v1979 = vpop.f32.mrb[0].mxu0
        %1980 = vmatprep.mubr.bf16.mxu0 %v1671
        %1981 = vmatmul.mubr.bf16.gmra.mrb[0].mxu0 %v1668
        %v1982 = vpop.f32.mrb[0].mxu0
        %v1983 = vadd.f32 0.0, %v1982
        %v1984 = vpop.f32.mrb[0].mxu0
        %v1985 = vpop.f32.mrb[0].mxu0
        %v1986 = vadd.f32 0.0, %v1985
        %v1987 = vpop.f32.mrb[0].mxu0
        %1988 = vmatprep.mubr.bf16.mxu0 %v1677
        %1989 = vmatmul.mubr.bf16.gmra.mrb[0].mxu0 %v1674
        %v1990 = vpop.f32.mrb[0].mxu0
        %v1991 = vadd.f32 0.0, %v1990
        %v1992 = vpop.f32.mrb[0].mxu0
        %v1993 = vpop.f32.mrb[0].mxu0
        %v1994 = vadd.f32 0.0, %v1993
        %v1995 = vpop.f32.mrb[0].mxu0
        %1996 = vmatprep.mubr.bf16.mxu0 %v1683
        %1997 = vmatmul.mubr.bf16.gmra.mrb[0].mxu0 %v1680
        %v1998 = vpop.f32.mrb[0].mxu0
        %v1999 = vadd.f32 0.0, %v1998
        %v2000 = vpop.f32.mrb[0].mxu0
        %v2001 = vpop.f32.mrb[0].mxu0
        %v2002 = vadd.f32 0.0, %v2001
        %v2003 = vpop.f32.mrb[0].mxu0
        %2004 = vmatprep.mubr.bf16.mxu0 %v1689
        %2005 = vmatmul.mubr.bf16.gmra.mrb[0].mxu0 %v1686
        %v2006 = vpop.f32.mrb[0].mxu0
        %v2007 = vadd.f32 0.0, %v2006
        %v2008 = vpop.f32.mrb[0].mxu0
        %v2009 = vpop.f32.mrb[0].mxu0
        %v2010 = vadd.f32 0.0, %v2009
        %v2011 = vpop.f32.mrb[0].mxu0
        %2012 = vmatprep.mubr.bf16.mxu0 %v1695
        %2013 = vmatmul.mubr.bf16.gmra.mrb[0].mxu0 %v1692
        %v2014 = vpop.f32.mrb[0].mxu0
        %v2015 = vadd.f32 0.0, %v2014
        %v2016 = vpop.f32.mrb[0].mxu0
        %v2017 = vpop.f32.mrb[0].mxu0
        %v2018 = vadd.f32 0.0, %v2017
        %v2019 = vpop.f32.mrb[0].mxu0
        %2020 = vmatprep.mubr.bf16.mxu0 %v1701
        %2021 = vmatmul.mubr.bf16.gmra.mrb[0].mxu0 %v1698
        %v2022 = vpop.f32.mrb[0].mxu0
        %v2023 = vadd.f32 0.0, %v2022
        %v2024 = vpop.f32.mrb[0].mxu0
        %v2025 = vpop.f32.mrb[0].mxu0
        %v2026 = vadd.f32 0.0, %v2025
        %v2027 = vpop.f32.mrb[0].mxu0
        %2028 = vmatprep.mubr.bf16.mxu0 %v1707
        %2029 = vmatmul.mubr.bf16.gmra.mrb[0].mxu0 %v1704
        %v2030 = vpop.f32.mrb[0].mxu0
        %v2031 = vadd.f32 0.0, %v2030
        %v2032 = vpop.f32.mrb[0].mxu0
        %v2033 = vpop.f32.mrb[0].mxu0
        %v2034 = vadd.f32 0.0, %v2033
        %v2035 = vpop.f32.mrb[0].mxu0
        %2036 = vmatprep.mubr.bf16.mxu0 %v1713
        %2037 = vmatmul.mubr.bf16.gmra.mrb[0].mxu0 %v1710
        %v2038 = vpop.f32.mrb[0].mxu0
        %v2039 = vadd.f32 0.0, %v2038
        %v2040 = vpop.f32.mrb[0].mxu0
        %v2041 = vpop.f32.mrb[0].mxu0
        %v2042 = vadd.f32 0.0, %v2041
        %v2043 = vpop.f32.mrb[0].mxu0
        %2044 = vmatprep.mubr.bf16.mxu0 %v1719
        %2045 = vmatmul.mubr.bf16.gmra.mrb[0].mxu0 %v1716
        %v2046 = vpop.f32.mrb[0].mxu0
        %v2047 = vadd.f32 0.0, %v2046
        %v2048 = vpop.f32.mrb[0].mxu0
        %v2049 = vpop.f32.mrb[0].mxu0
        %v2050 = vadd.f32 0.0, %v2049
        %v2051 = vpop.f32.mrb[0].mxu0
        %2052 = vmatprep.mubr.bf16.mxu0 %v1725
        %2053 = vmatmul.mubr.bf16.gmra.mrb[0].mxu0 %v1722
        %v2054 = vpop.f32.mrb[0].mxu0
        %v2055 = vadd.f32 0.0, %v2054
        %v2056 = vpop.f32.mrb[0].mxu0
        %v2057 = vpop.f32.mrb[0].mxu0
        %v2058 = vadd.f32 0.0, %v2057
        %v2059 = vpop.f32.mrb[0].mxu0
        %2060 = vmatprep.mubr.bf16.mxu0 %v1731
        %2061 = vmatmul.mubr.bf16.gmra.mrb[0].mxu0 %v1728
        %v2062 = vpop.f32.mrb[0].mxu0
        %v2063 = vadd.f32 0.0, %v2062
        %v2064 = vpop.f32.mrb[0].mxu0
        %v2065 = vpop.f32.mrb[0].mxu0
        %v2066 = vadd.f32 0.0, %v2065
        %v2067 = vpop.f32.mrb[0].mxu0
        %2068 = vdwg.mxu0
        %v2069 = vrcp.pop %v1798
        %v2070 = vrcp.pop %v1801
        %v2071 = vrcp.pop %v1804
        %v2072 = vrcp.pop %v1807
        %v2073 = vrcp.pop %v1810
        %v2074 = vrcp.pop %v1813
        %v2075 = vrcp.pop %v1816
        %v2076 = vrcp.pop %v1819
        %v2077 = vrcp.pop %v1822
        %v2078 = vrcp.pop %v1825
        %v2079 = vrcp.pop %v1828
        %v2080 = vrcp.pop %v1831
        %v2081 = vrcp.pop %v1834
        %v2082 = vrcp.pop %v1837
        %v2083 = vrcp.pop %v1840
        %v2084 = vrcp.pop %v1843
        %v2085 = vrcp.pop %v1846
        %v2086 = vrcp.pop %v1849
        %v2087 = vrcp.pop %v1852
        %v2088 = vrcp.pop %v1855
        %v2089 = vrcp.pop %v1858
        %v2090 = vrcp.pop %v1861
        %v2091 = vrcp.pop %v1864
        %v2092 = vrcp.pop %v1867
        %v2093 = vrcp.pop %v1870
        %v2094 = vrcp.pop %v1873
        %v2095 = vrcp.pop %v1876
        %v2096 = vrcp.pop %v1879
        %v2097 = vrcp.pop %v1882
        %v2098 = vrcp.pop %v1885
        %v2099 = vrcp.pop %v1888
        %v2100 = vrcp.pop %v1891
        %v2101 = vmul.f32 %v1943, %v2069
        %v2102 = vmul.f32 %v1946, %v2070
        %v2103 = vmul.f32 %v1951, %v2071
        %v2104 = vmul.f32 %v1954, %v2072
        %v2105 = vmul.f32 %v1959, %v2073
        %v2106 = vmul.f32 %v1962, %v2074
        %v2107 = vmul.f32 %v1967, %v2075
        %v2108 = vmul.f32 %v1970, %v2076
        %v2109 = vmul.f32 %v1975, %v2077
        %v2110 = vmul.f32 %v1978, %v2078
        %v2111 = vmul.f32 %v1983, %v2079
        %v2112 = vmul.f32 %v1986, %v2080
        %v2113 = vmul.f32 %v1991, %v2081
        %v2114 = vmul.f32 %v1994, %v2082
        %v2115 = vmul.f32 %v1999, %v2083
        %v2116 = vmul.f32 %v2002, %v2084
        %v2117 = vmul.f32 %v2007, %v2085
        %v2118 = vmul.f32 %v2010, %v2086
        %v2119 = vmul.f32 %v2015, %v2087
        %v2120 = vmul.f32 %v2018, %v2088
        %v2121 = vmul.f32 %v2023, %v2089
        %v2122 = vmul.f32 %v2026, %v2090
        %v2123 = vmul.f32 %v2031, %v2091
        %v2124 = vmul.f32 %v2034, %v2092
        %v2125 = vmul.f32 %v2039, %v2093
        %v2126 = vmul.f32 %v2042, %v2094
        %v2127 = vmul.f32 %v2047, %v2095
        %v2128 = vmul.f32 %v2050, %v2096
        %v2129 = vmul.f32 %v2055, %v2097
        %v2130 = vmul.f32 %v2058, %v2098
        %v2131 = vmul.f32 %v2063, %v2099
        %v2132 = vmul.f32 %v2066, %v2100
        %v2133 = vadd.f32 %v2101, %v939
        %v2134 = vadd.f32 %v2102, %v940
        %v2135 = vadd.f32 %v2103, %v941
        %v2136 = vadd.f32 %v2104, %v942
        %v2137 = vadd.f32 %v2105, %v943
        %v2138 = vadd.f32 %v2106, %v944
        %v2139 = vadd.f32 %v2107, %v945
        %v2140 = vadd.f32 %v2108, %v946
        %v2141 = vadd.f32 %v2109, %v947
        %v2142 = vadd.f32 %v2110, %v948
        %v2143 = vadd.f32 %v2111, %v949
        %v2144 = vadd.f32 %v2112, %v950
        %v2145 = vadd.f32 %v2113, %v951
        %v2146 = vadd.f32 %v2114, %v952
        %v2147 = vadd.f32 %v2115, %v953
        %v2148 = vadd.f32 %v2116, %v954
        %v2149 = vadd.f32 %v2117, %v955
        %v2150 = vadd.f32 %v2118, %v956
        %v2151 = vadd.f32 %v2119, %v957
        %v2152 = vadd.f32 %v2120, %v958
        %v2153 = vadd.f32 %v2121, %v959
        %v2154 = vadd.f32 %v2122, %v960
        %v2155 = vadd.f32 %v2123, %v961
        %v2156 = vadd.f32 %v2124, %v962
        %v2157 = vadd.f32 %v2125, %v963
        %v2158 = vadd.f32 %v2126, %v964
        %v2159 = vadd.f32 %v2127, %v965
        %v2160 = vadd.f32 %v2128, %v966
        %v2161 = vadd.f32 %v2129, %v967
        %v2162 = vadd.f32 %v2130, %v968
        %v2163 = vadd.f32 %v2131, %v969
        %v2164 = vadd.f32 %v2132, %v970
        %2165 = vst [vmem:[%s354] sm:$0xff] %v2133
        %2166 = vst [vmem:[%s354 + $0x8] sm:$0xff] %v2134
        %2167 = vst [vmem:[%s354 + $0x10] sm:$0xff] %v2135
        %2168 = vst [vmem:[%s354 + $0x18] sm:$0xff] %v2136
        %2169 = vst [vmem:[%s354 + $0x20] sm:$0xff] %v2137
        %2170 = vst [vmem:[%s354 + $0x28] sm:$0xff] %v2138
        %2171 = vst [vmem:[%s354 + $0x30] sm:$0xff] %v2139
        %2172 = vst [vmem:[%s354 + $0x38] sm:$0xff] %v2140
        %2173 = vst [vmem:[%s354 + $0x40] sm:$0xff] %v2141
        %2174 = vst [vmem:[%s354 + $0x48] sm:$0xff] %v2142
        %2175 = vst [vmem:[%s354 + $0x50] sm:$0xff] %v2143
        %2176 = vst [vmem:[%s354 + $0x58] sm:$0xff] %v2144
        %2177 = vst [vmem:[%s354 + $0x60] sm:$0xff] %v2145
        %2178 = vst [vmem:[%s354 + $0x68] sm:$0xff] %v2146
        %2179 = vst [vmem:[%s354 + $0x70] sm:$0xff] %v2147
        %2180 = vst [vmem:[%s354 + $0x78] sm:$0xff] %v2148
        %2181 = vst [vmem:[%s354 + $0x80] sm:$0xff] %v2149
        %2182 = vst [vmem:[%s354 + $0x88] sm:$0xff] %v2150
        %2183 = vst [vmem:[%s354 + $0x90] sm:$0xff] %v2151
        %2184 = vst [vmem:[%s354 + $0x98] sm:$0xff] %v2152
        %2185 = vst [vmem:[%s354 + $0xa0] sm:$0xff] %v2153
        %2186 = vst [vmem:[%s354 + $0xa8] sm:$0xff] %v2154
        %2187 = vst [vmem:[%s354 + $0xb0] sm:$0xff] %v2155
        %2188 = vst [vmem:[%s354 + $0xb8] sm:$0xff] %v2156
        %2189 = vst [vmem:[%s354 + $0xc0] sm:$0xff] %v2157
        %2190 = vst [vmem:[%s354 + $0xc8] sm:$0xff] %v2158
        %2191 = vst [vmem:[%s354 + $0xd0] sm:$0xff] %v2159
        %2192 = vst [vmem:[%s354 + $0xd8] sm:$0xff] %v2160
        %2193 = vst [vmem:[%s354 + $0xe0] sm:$0xff] %v2161
        %2194 = vst [vmem:[%s354 + $0xe8] sm:$0xff] %v2162
        %2195 = vst [vmem:[%s354 + $0xf0] sm:$0xff] %v2163
        %2196 = vst [vmem:[%s354 + $0xf8] sm:$0xff] %v2164
        %s2197 = sand.u32 %s200, 1
        %s2198 = scalar_lea.sflag [#allocation6], %s2197
        %s2199 = sand.u32 %s200, 1
        %s2200 = smul.addr %s2199, 256
        %s2201 = scalar_lea.vmem [#allocation12], %s2200
        // Predicated region
        $region69: #{tpu_custom_call.1} parent=47 // pred_check
          %p2202 = pneg %p210
        $region70: #{tpu_custom_call.1} parent=47 // pred_check_branch
          %2204 = sbr.rel (%p2202) target = $region72
        $region71: #{tpu_custom_call.1} parent=47 // pred_region
          %s2205 = smul.u32 32, %s31
          %s2207 = ssub.s32 4096, 4096
          %2208 = vsyncadd %s2198, %s2207
          %s2209 = smul.addr %s30, 32
          %s2210 = sadd.s32 %s2205, %s2209
          %s2211 = smul.addr %s2210, 128
          %s2212 = scalar_lea.hbm %s7, %s2211
          %s2213 = sshll.u32 %s2201, 4
          %s2214 = int_to_ptr.vmem [resolvable:$true] %s2213
          %2219 = dma.vmem_to_hbm [thread:$0]  %s2214, 4096, %s2212, %s2198, 128, 128, 8
        $region72: #{tpu_custom_call.1} parent=47 // pred_fallthru
          _
      $region48: #{tpu_custom_call.1} parent=5 // pred_fallthru
        _
      %p2220 = scmp.le.s32.totalorder 2, %s21
      // Predicated region
      $region73: #{tpu_custom_call.1} parent=5 // pred_check
        %p2221 = pneg %p2220
      $region74: #{tpu_custom_call.1} parent=5 // pred_check_branch
        %2223 = sbr.rel (%p2221) target = $region76
      $region75: #{tpu_custom_call.1} parent=5 // pred_region
        %s2224 = ssub.s32 %s21, 2
        // Predicated region
        $region77: #{tpu_custom_call.1} parent=75 // pred_check
          %p2225 = pneg %p216
        $region78: #{tpu_custom_call.1} parent=75 // pred_check_branch
          %2227 = sbr.rel (%p2225) target = $region80
        $region79: #{tpu_custom_call.1} parent=75 // pred_region
          %s2228 = sand.u32 %s201, 1
          %s2229 = scalar_lea.sflag [#allocation6], %s2228
          %s2230 = sand.u32 %s201, 1
          %s2231 = smul.addr %s2230, 256
          %s2232 = scalar_lea.vmem [#allocation12], %s2231
          %2233 = dma.done %s2229, 4096
        $region80: #{tpu_custom_call.1} parent=75 // pred_fallthru
          _
      $region76: #{tpu_custom_call.1} parent=5 // pred_fallthru
        _
    $region6: #{tpu_custom_call.1} parent=1 // loop_footer
      %s25 = sadd.s32 1, %s21
    $region7: #{tpu_custom_call.1} parent=1 // loop_footer_branch
      %20 = sbr.rel target = $region3
    $region8: #{tpu_custom_call.1} parent=1 // loop_exit
      _
    %2234 = vsyncpa [#allocation5], 1
    %s2235 = scalar_lea.sflag [#allocation5], 1
    %2236 = vsyncpa %s2235, 1
    %2237 = vsyncpa [#allocation8], 1
    %2238 = vsyncpa [#allocation11], 1
    %2239 = vsyncpa [#allocation6], 1
    %s2240 = scalar_lea.sflag [#allocation6], 1
    %2241 = vsyncpa %s2240, 1

</llo_original>
